<compile_context>
chip_gen: v7x
topology: tpu7x:2x2x1
jax: 0.10.0
libtpu: 0.0.40
codegen_flags: <defaults>
</compile_context>

<pallas_src>
import jax
import jax.numpy as jnp
from jax.experimental import pallas as pl
from jax.experimental.pallas import tpu as pltpu

# ----------------------------- config (small) ------------------------------
B = 2          # batch
T = 8          # sequence length
C = 32         # n_embd
H = 4          # n_head
HD = C // H    # head dim
N = B * T      # flattened rows
PARAM_STD = 0.02
EPS = 1e-5
SOFTMAX_SCALE = 8.0 / C        # matches flash_attn_qkvpacked_func(softmax_scale=8/n_embd)
NEG_BIG = -1e30                # finite mask bias (avoids inf-inf NaN paths)


# ------------------------------ Pallas kernel ------------------------------
def block_kernel(x_ref, ln1_ref, wq_ref, wk_ref, wv_ref, wo_ref,
                 ln2_ref, wfch_ref, wfcg_ref, wmlp_ref, bias_ref, out_ref):
    """Single invocation over the whole (N, C) = (B*T, C) activation slab."""
    f32 = jnp.float32
    bf16 = jnp.bfloat16

    x = x_ref[...].astype(f32)                                   # (N, C)

    def rmsnorm(v, w_ref):
        # RMSNorm in f32 (matches LayerNorm._norm), then scale by weight (1, C).
        ms = jnp.mean(v * v, axis=-1, keepdims=True)
        return (v * jax.lax.rsqrt(ms + EPS)) * w_ref[...]

    # ---------------- attention branch ----------------
    xn1 = rmsnorm(x, ln1_ref)                                    # (N, C) f32
    xb = jnp.broadcast_to(xn1[None], (H, N, C)).astype(bf16)     # (H, N, C)

    # Head-major weights (host-prepped); softmax scale already folded into wq.
    q = jnp.einsum('hnc,hcd->hnd', xb, wq_ref[...], preferred_element_type=f32)
    k = jnp.einsum('hnc,hcd->hnd', xb, wk_ref[...], preferred_element_type=f32)
    v = jnp.einsum('hnc,hcd->hnd', xb, wv_ref[...], preferred_element_type=f32)

    scores = jnp.einsum('hnd,hmd->hnm', q.astype(bf16), k.astype(bf16),
                        preferred_element_type=f32)              # (H, N, N)
    scores = scores + bias_ref[...][None]                        # block-diag causal bias

    m = jnp.max(scores, axis=-1, keepdims=True)
    p = jnp.exp(scores - m)
    p = p * pl.reciprocal(jnp.sum(p, axis=-1, keepdims=True), approx=True)

    y = jnp.einsum('hnm,hmd->hnd', p.astype(bf16), v.astype(bf16),
                   preferred_element_type=f32)                   # (H, N, HD)
    # Per-head output projection folded in; sum over heads recombines to (N, C)
    # without any transpose/concat.
    attn = jnp.einsum('hnd,hdc->hnc', y.astype(bf16), wo_ref[...],
                      preferred_element_type=f32).sum(axis=0)    # (N, C)
    x = x + attn                                                 # residual 1

    # ---------------- MLP branch ----------------
    xn2 = rmsnorm(x, ln2_ref).astype(bf16)                       # (N, C)
    h1 = jnp.dot(xn2, wfch_ref[...], preferred_element_type=f32)   # (N, 2C)
    g = jnp.dot(xn2, wfcg_ref[...], preferred_element_type=f32)    # (N, 2C)
    act = h1 * (g * jax.nn.sigmoid(g))                           # SwiGLU: h * silu(gate)
    mlp = jnp.dot(act.astype(bf16), wmlp_ref[...],
                  preferred_element_type=f32)                    # (N, C)
    out_ref[...] = (x + mlp).astype(out_ref.dtype)               # residual 2


# ------------------------------- wrapper -----------------------------------
def block_forward(x, params):
    ln1_w, wqkv, wattn, ln2_w, wfc, wmlp = params
    bf16 = jnp.bfloat16

    # One-time host-side weight layout prep (pure reshape/cast, outside the kernel):
    #  - head-major Q/K/V weights (H, C, HD); softmax scale folded into Wq
    #  - per-head output projection (H, HD, C)
    #  - SwiGLU halves split into two (C, 2C) matrices
    #  - bf16 at MXU-operand boundary (f32 accumulation inside the kernel)
    wq = (wqkv[:, :C] * SOFTMAX_SCALE).reshape(C, H, HD).transpose(1, 0, 2).astype(bf16)
    wk = wqkv[:, C:2 * C].reshape(C, H, HD).transpose(1, 0, 2).astype(bf16)
    wv = wqkv[:, 2 * C:].reshape(C, H, HD).transpose(1, 0, 2).astype(bf16)
    wo = wattn.reshape(H, HD, C).astype(bf16)
    wfc_h = wfc[:, :2 * C].astype(bf16)
    wfc_g = wfc[:, 2 * C:].astype(bf16)
    wmlp_b = wmlp.astype(bf16)

    # Block-diagonal causal additive bias over the flattened (B*T) rows, built once.
    r = jnp.arange(N)[:, None]
    c = jnp.arange(N)[None, :]
    allowed = (r // T == c // T) & (r >= c)
    bias = jnp.where(allowed, 0.0, NEG_BIG).astype(jnp.float32)   # (N, N)

    x2 = x.reshape(N, C)                                          # free leading-dim flatten

    def vmem():
        return pl.BlockSpec(memory_space=pltpu.MemorySpace.VMEM)

    out = pl.pallas_call(
        block_kernel,
        out_shape=jax.ShapeDtypeStruct((N, C), x.dtype),
        in_specs=[vmem() for _ in range(11)],
        out_specs=vmem(),
    )(x2, ln1_w, wq, wk, wv, wo, ln2_w, wfc_h, wfc_g, wmlp_b, bias)

    return out.reshape(B, T, C)


# --------------------------- pure-JAX reference -----------------------------
def block_reference(x, params):
    ln1_w, wqkv, wattn, ln2_w, wfc, wmlp = params

    def rmsnorm(v, w):
        v32 = v.astype(jnp.float32)
        ms = jnp.mean(v32 * v32, axis=-1, keepdims=True)
        return (v32 * jax.lax.rsqrt(ms + EPS)).astype(v.dtype) * w

    xn1 = rmsnorm(x, ln1_w[0])
    qkv = xn1 @ wqkv
    q, k, v = jnp.split(qkv, 3, axis=-1)
    q = q.reshape(B, T, H, HD).transpose(0, 2, 1, 3)
    k = k.reshape(B, T, H, HD).transpose(0, 2, 1, 3)
    v = v.reshape(B, T, H, HD).transpose(0, 2, 1, 3)
    scores = jnp.einsum("bhqd,bhkd->bhqk", q, k) * SOFTMAX_SCALE
    mask = jnp.tril(jnp.ones((T, T), bool))
    scores = jnp.where(mask, scores, -jnp.inf)
    p = jax.nn.softmax(scores, axis=-1)
    y = jnp.einsum("bhqk,bhkd->bhqd", p, v).transpose(0, 2, 1, 3).reshape(B, T, C)
    x = x + y @ wattn

    xn2 = rmsnorm(x, ln2_w[0])
    hcat = xn2 @ wfc
    h_half, gate = hcat[..., :2 * C], hcat[..., 2 * C:]
    act = h_half * (gate * jax.nn.sigmoid(gate))
    x = x + act @ wmlp
    return x


# --------------------------------- main -------------------------------------
if __name__ == "__main__":
    key = jax.random.PRNGKey(0)
    kx, k1, k2, k3, k4 = jax.random.split(key, 5)

    x = jax.random.normal(kx, (B, T, C), dtype=jnp.float32)

    # Deterministic parameter init (shapes from Block.__init__, bias=False).
    ln1_w = jnp.ones((1, C), jnp.float32)                                   # ln_1.weight
    ln2_w = jnp.ones((1, C), jnp.float32)                                   # ln_2.weight
    wqkv = PARAM_STD * jax.random.normal(k1, (C, 3 * C), jnp.float32)       # attn.c_attn
    wattn = PARAM_STD * jax.random.normal(k2, (C, C), jnp.float32)          # attn.c_proj
    wfc = PARAM_STD * jax.random.normal(k3, (C, 4 * C), jnp.float32)        # mlp.c_fc
    wmlp = (PARAM_STD / jnp.sqrt(2.0)) * jax.random.normal(
        k4, (2 * C, C), jnp.float32)                                        # mlp.c_proj

    params = (ln1_w, wqkv, wattn, ln2_w, wfc, wmlp)

    out = block_forward(x, params)
    out = jax.block_until_ready(out)

    ref = block_reference(x, params)
    assert out.shape == (B, T, C) and out.dtype == jnp.float32
    # bf16 MXU operands + approx reciprocal -> slightly looser tolerance than pure f32.
    assert jnp.allclose(out, ref, atol=2e-3, rtol=2e-3), "mismatch vs reference"

    print("KERNEL_OK")
</pallas_src>

<mosaic_0001>
module attributes {stable_mosaic.version = 11 : i64} {
  func.func @block_kernel(%arg0: memref<16x32xf32, #tpu.memory_space<vmem>>, %arg1: memref<1x32xf32, #tpu.memory_space<vmem>>, %arg2: memref<4x32x8xbf16, #tpu.memory_space<vmem>>, %arg3: memref<4x32x8xbf16, #tpu.memory_space<vmem>>, %arg4: memref<4x32x8xbf16, #tpu.memory_space<vmem>>, %arg5: memref<4x8x32xbf16, #tpu.memory_space<vmem>>, %arg6: memref<1x32xf32, #tpu.memory_space<vmem>>, %arg7: memref<32x64xbf16, #tpu.memory_space<vmem>>, %arg8: memref<32x64xbf16, #tpu.memory_space<vmem>>, %arg9: memref<64x32xbf16, #tpu.memory_space<vmem>>, %arg10: memref<16x16xf32, #tpu.memory_space<vmem>>, %arg11: memref<16x32xf32, #tpu.memory_space<vmem>>) attributes {dimension_semantics = [], scalar_prefetch = 0 : i64, scratch_operands = 0 : i64, tpu.core_type = #tpu.core_type<tc>} {
    %c0 = arith.constant 0 : index
    %c0_0 = arith.constant 0 : index
    %0 = vector.load %arg0[%c0, %c0_0] : memref<16x32xf32, #tpu.memory_space<vmem>>, vector<16x32xf32>
    %1 = arith.mulf %0, %0 : vector<16x32xf32>
    %cst = arith.constant dense<0.000000e+00> : vector<16xf32>
    %2 = vector.multi_reduction <add>, %1, %cst [1] : vector<16x32xf32> to vector<16xf32>
    %3 = vector.shape_cast %2 : vector<16xf32> to vector<16x1xf32>
    %cst_1 = arith.constant 3.200000e+01 : f32
    %4 = vector.broadcast %cst_1 : f32 to vector<16x1xf32>
    %5 = arith.divf %3, %4 : vector<16x1xf32>
    %cst_2 = arith.constant 9.99999974E-6 : f32
    %6 = vector.broadcast %cst_2 : f32 to vector<16x1xf32>
    %7 = arith.addf %5, %6 : vector<16x1xf32>
    %8 = math.rsqrt %7 : vector<16x1xf32>
    %9 = vector.broadcast %8 : vector<16x1xf32> to vector<16x32xf32>
    %10 = arith.mulf %0, %9 : vector<16x32xf32>
    %c0_3 = arith.constant 0 : index
    %c0_4 = arith.constant 0 : index
    %11 = vector.load %arg1[%c0_3, %c0_4] : memref<1x32xf32, #tpu.memory_space<vmem>>, vector<1x32xf32>
    %12 = vector.broadcast %11 : vector<1x32xf32> to vector<16x32xf32>
    %13 = arith.mulf %10, %12 : vector<16x32xf32>
    %14 = vector.shape_cast %13 : vector<16x32xf32> to vector<1x16x32xf32>
    %15 = vector.shape_cast %14 : vector<1x16x32xf32> to vector<1x16x32xf32>
    %16 = vector.broadcast %15 : vector<1x16x32xf32> to vector<4x16x32xf32>
    %17 = arith.truncf %16 : vector<4x16x32xf32> to vector<4x16x32xbf16>
    %c0_5 = arith.constant 0 : index
    %c0_6 = arith.constant 0 : index
    %c0_7 = arith.constant 0 : index
    %18 = vector.load %arg2[%c0_5, %c0_6, %c0_7] : memref<4x32x8xbf16, #tpu.memory_space<vmem>>, vector<4x32x8xbf16>
    "tpu.trace_start"() <{level = 10 : i32, message = "hnc,hcd->hnd"}> : () -> ()
    %cst_8 = arith.constant dense<0.000000e+00> : vector<4x16x8xf32>
    %19 = tpu.matmul %17, %18, %cst_8 {dimension_numbers = #tpu.dot_dimension_numbers<[2], [1], [1], [2], [0, 0, 0, 1, 1, 2], [0], [0]>} : vector<4x16x32xbf16>, vector<4x32x8xbf16>, vector<4x16x8xf32> -> vector<4x16x8xf32>
    "tpu.trace_stop"() : () -> ()
    %c0_9 = arith.constant 0 : index
    %c0_10 = arith.constant 0 : index
    %c0_11 = arith.constant 0 : index
    %20 = vector.load %arg3[%c0_9, %c0_10, %c0_11] : memref<4x32x8xbf16, #tpu.memory_space<vmem>>, vector<4x32x8xbf16>
    "tpu.trace_start"() <{level = 10 : i32, message = "hnc,hcd->hnd"}> : () -> ()
    %cst_12 = arith.constant dense<0.000000e+00> : vector<4x16x8xf32>
    %21 = tpu.matmul %17, %20, %cst_12 {dimension_numbers = #tpu.dot_dimension_numbers<[2], [1], [1], [2], [0, 0, 0, 1, 1, 2], [0], [0]>} : vector<4x16x32xbf16>, vector<4x32x8xbf16>, vector<4x16x8xf32> -> vector<4x16x8xf32>
    "tpu.trace_stop"() : () -> ()
    %c0_13 = arith.constant 0 : index
    %c0_14 = arith.constant 0 : index
    %c0_15 = arith.constant 0 : index
    %22 = vector.load %arg4[%c0_13, %c0_14, %c0_15] : memref<4x32x8xbf16, #tpu.memory_space<vmem>>, vector<4x32x8xbf16>
    "tpu.trace_start"() <{level = 10 : i32, message = "hnc,hcd->hnd"}> : () -> ()
    %cst_16 = arith.constant dense<0.000000e+00> : vector<4x16x8xf32>
    %23 = tpu.matmul %17, %22, %cst_16 {dimension_numbers = #tpu.dot_dimension_numbers<[2], [1], [1], [2], [0, 0, 0, 1, 1, 2], [0], [0]>} : vector<4x16x32xbf16>, vector<4x32x8xbf16>, vector<4x16x8xf32> -> vector<4x16x8xf32>
    "tpu.trace_stop"() : () -> ()
    %24 = arith.truncf %19 : vector<4x16x8xf32> to vector<4x16x8xbf16>
    %25 = arith.truncf %21 : vector<4x16x8xf32> to vector<4x16x8xbf16>
    "tpu.trace_start"() <{level = 10 : i32, message = "hnd,hmd->hnm"}> : () -> ()
    %cst_17 = arith.constant dense<0.000000e+00> : vector<4x16x16xf32>
    %26 = tpu.matmul %24, %25, %cst_17 {dimension_numbers = #tpu.dot_dimension_numbers<[2], [2], [1], [1], [0, 0, 0, 1, 1, 1], [0], [0]>} : vector<4x16x8xbf16>, vector<4x16x8xbf16>, vector<4x16x16xf32> -> vector<4x16x16xf32>
    "tpu.trace_stop"() : () -> ()
    %c0_18 = arith.constant 0 : index
    %c0_19 = arith.constant 0 : index
    %27 = vector.load %arg10[%c0_18, %c0_19] : memref<16x16xf32, #tpu.memory_space<vmem>>, vector<16x16xf32>
    %28 = vector.shape_cast %27 : vector<16x16xf32> to vector<1x16x16xf32>
    %29 = vector.broadcast %28 : vector<1x16x16xf32> to vector<4x16x16xf32>
    %30 = arith.addf %26, %29 : vector<4x16x16xf32>
    %cst_20 = arith.constant dense<0xFF800000> : vector<4x16xf32>
    %31 = vector.multi_reduction <maximumf>, %30, %cst_20 [2] : vector<4x16x16xf32> to vector<4x16xf32>
    %32 = vector.shape_cast %31 : vector<4x16xf32> to vector<4x16x1xf32>
    %33 = vector.broadcast %32 : vector<4x16x1xf32> to vector<4x16x16xf32>
    %34 = arith.subf %30, %33 : vector<4x16x16xf32>
    %35 = math.exp %34 : vector<4x16x16xf32>
    %cst_21 = arith.constant dense<0.000000e+00> : vector<4x16xf32>
    %36 = vector.multi_reduction <add>, %35, %cst_21 [2] : vector<4x16x16xf32> to vector<4x16xf32>
    %37 = vector.shape_cast %36 : vector<4x16xf32> to vector<4x16x1xf32>
    %38 = tpu.reciprocal %37 {approx = true} : vector<4x16x1xf32> -> vector<4x16x1xf32>
    %39 = vector.broadcast %38 : vector<4x16x1xf32> to vector<4x16x16xf32>
    %40 = arith.mulf %35, %39 : vector<4x16x16xf32>
    %41 = arith.truncf %40 : vector<4x16x16xf32> to vector<4x16x16xbf16>
    %42 = arith.truncf %23 : vector<4x16x8xf32> to vector<4x16x8xbf16>
    "tpu.trace_start"() <{level = 10 : i32, message = "hnm,hmd->hnd"}> : () -> ()
    %cst_22 = arith.constant dense<0.000000e+00> : vector<4x16x8xf32>
    %43 = tpu.matmul %41, %42, %cst_22 {dimension_numbers = #tpu.dot_dimension_numbers<[2], [1], [1], [2], [0, 0, 0, 1, 1, 2], [0], [0]>} : vector<4x16x16xbf16>, vector<4x16x8xbf16>, vector<4x16x8xf32> -> vector<4x16x8xf32>
    "tpu.trace_stop"() : () -> ()
    %44 = arith.truncf %43 : vector<4x16x8xf32> to vector<4x16x8xbf16>
    %c0_23 = arith.constant 0 : index
    %c0_24 = arith.constant 0 : index
    %c0_25 = arith.constant 0 : index
    %45 = vector.load %arg5[%c0_23, %c0_24, %c0_25] : memref<4x8x32xbf16, #tpu.memory_space<vmem>>, vector<4x8x32xbf16>
    "tpu.trace_start"() <{level = 10 : i32, message = "hnd,hdc->hnc"}> : () -> ()
    %cst_26 = arith.constant dense<0.000000e+00> : vector<4x16x32xf32>
    %46 = tpu.matmul %44, %45, %cst_26 {dimension_numbers = #tpu.dot_dimension_numbers<[2], [1], [1], [2], [0, 0, 0, 1, 1, 2], [0], [0]>} : vector<4x16x8xbf16>, vector<4x8x32xbf16>, vector<4x16x32xf32> -> vector<4x16x32xf32>
    "tpu.trace_stop"() : () -> ()
    %cst_27 = arith.constant dense<0.000000e+00> : vector<16x32xf32>
    %47 = vector.multi_reduction <add>, %46, %cst_27 [0] : vector<4x16x32xf32> to vector<16x32xf32>
    %48 = arith.addf %0, %47 : vector<16x32xf32>
    %49 = arith.mulf %48, %48 : vector<16x32xf32>
    %cst_28 = arith.constant dense<0.000000e+00> : vector<16xf32>
    %50 = vector.multi_reduction <add>, %49, %cst_28 [1] : vector<16x32xf32> to vector<16xf32>
    %51 = vector.shape_cast %50 : vector<16xf32> to vector<16x1xf32>
    %cst_29 = arith.constant 3.200000e+01 : f32
    %52 = vector.broadcast %cst_29 : f32 to vector<16x1xf32>
    %53 = arith.divf %51, %52 : vector<16x1xf32>
    %cst_30 = arith.constant 9.99999974E-6 : f32
    %54 = vector.broadcast %cst_30 : f32 to vector<16x1xf32>
    %55 = arith.addf %53, %54 : vector<16x1xf32>
    %56 = math.rsqrt %55 : vector<16x1xf32>
    %57 = vector.broadcast %56 : vector<16x1xf32> to vector<16x32xf32>
    %58 = arith.mulf %48, %57 : vector<16x32xf32>
    %c0_31 = arith.constant 0 : index
    %c0_32 = arith.constant 0 : index
    %59 = vector.load %arg6[%c0_31, %c0_32] : memref<1x32xf32, #tpu.memory_space<vmem>>, vector<1x32xf32>
    %60 = vector.broadcast %59 : vector<1x32xf32> to vector<16x32xf32>
    %61 = arith.mulf %58, %60 : vector<16x32xf32>
    %62 = arith.truncf %61 : vector<16x32xf32> to vector<16x32xbf16>
    %c0_33 = arith.constant 0 : index
    %c0_34 = arith.constant 0 : index
    %63 = vector.load %arg7[%c0_33, %c0_34] : memref<32x64xbf16, #tpu.memory_space<vmem>>, vector<32x64xbf16>
    %cst_35 = arith.constant dense<0.000000e+00> : vector<16x64xf32>
    %64 = tpu.matmul %62, %63, %cst_35 {dimension_numbers = #tpu.dot_dimension_numbers<[1], [0], [0], [1], [0, 0, 1, 1], [], []>} : vector<16x32xbf16>, vector<32x64xbf16>, vector<16x64xf32> -> vector<16x64xf32>
    %c0_36 = arith.constant 0 : index
    %c0_37 = arith.constant 0 : index
    %65 = vector.load %arg8[%c0_36, %c0_37] : memref<32x64xbf16, #tpu.memory_space<vmem>>, vector<32x64xbf16>
    %cst_38 = arith.constant dense<0.000000e+00> : vector<16x64xf32>
    %66 = tpu.matmul %62, %65, %cst_38 {dimension_numbers = #tpu.dot_dimension_numbers<[1], [0], [0], [1], [0, 0, 1, 1], [], []>} : vector<16x32xbf16>, vector<32x64xbf16>, vector<16x64xf32> -> vector<16x64xf32>
    %67 = arith.negf %66 : vector<16x64xf32>
    %68 = math.exp %67 : vector<16x64xf32>
    %cst_39 = arith.constant 1.000000e+00 : f32
    %69 = vector.broadcast %cst_39 : f32 to vector<16x64xf32>
    %70 = arith.addf %69, %68 : vector<16x64xf32>
    %71 = arith.divf %69, %70 : vector<16x64xf32>
    %72 = arith.mulf %66, %71 : vector<16x64xf32>
    %73 = arith.mulf %64, %72 : vector<16x64xf32>
    %74 = arith.truncf %73 : vector<16x64xf32> to vector<16x64xbf16>
    %c0_40 = arith.constant 0 : index
    %c0_41 = arith.constant 0 : index
    %75 = vector.load %arg9[%c0_40, %c0_41] : memref<64x32xbf16, #tpu.memory_space<vmem>>, vector<64x32xbf16>
    %cst_42 = arith.constant dense<0.000000e+00> : vector<16x32xf32>
    %76 = tpu.matmul %74, %75, %cst_42 {dimension_numbers = #tpu.dot_dimension_numbers<[1], [0], [0], [1], [0, 0, 1, 1], [], []>} : vector<16x64xbf16>, vector<64x32xbf16>, vector<16x32xf32> -> vector<16x32xf32>
    %77 = arith.addf %48, %76 : vector<16x32xf32>
    %c0_43 = arith.constant 0 : index
    %c0_44 = arith.constant 0 : index
    %78 = vector.load %arg11[%c0_43, %c0_44] : memref<16x32xf32, #tpu.memory_space<vmem>>, vector<16x32xf32>
    tpu.vector_store %arg11[%c0_43, %c0_44], %77 {strides = array<i32>} : memref<16x32xf32, #tpu.memory_space<vmem>>, vector<16x32xf32>,
    return
  }
}

</mosaic_0001>

<llo_original>
// kernel: tpu_custom_call.1
$region0: #{tpu_custom_call.1}
  #allocation0 [shape = 'u32[]', space=smem, size = 0x4, offset = 0x4, fixed_abs, tag = 'smem constant byte address 0x4 - core index']
  #allocation1 [shape = 'u32[144,128]{1,0:T(1,128)}', space=vmem, size = 0x12000, scoped, tag = 'internal scratch']
  %s0 = inlined_call_operand.vmem [shape: f32[16,32], index: 0, kind: input, shape index: {}]
  %s1 = inlined_call_operand.vmem [shape: f32[1,32], index: 1, kind: input, shape index: {}]
  %s2 = inlined_call_operand.vmem [shape: bf16[4,32,8], index: 2, kind: input, shape index: {}]
  %s3 = inlined_call_operand.vmem [shape: bf16[4,32,8], index: 3, kind: input, shape index: {}]
  %s4 = inlined_call_operand.vmem [shape: bf16[4,32,8], index: 4, kind: input, shape index: {}]
  %s5 = inlined_call_operand.vmem [shape: bf16[4,8,32], index: 5, kind: input, shape index: {}]
  %s6 = inlined_call_operand.vmem [shape: f32[1,32], index: 6, kind: input, shape index: {}]
  %s7 = inlined_call_operand.vmem [shape: bf16[32,64], index: 7, kind: input, shape index: {}]
  %s8 = inlined_call_operand.vmem [shape: bf16[32,64], index: 8, kind: input, shape index: {}]
  %s9 = inlined_call_operand.vmem [shape: bf16[64,32], index: 9, kind: input, shape index: {}]
  %s10 = inlined_call_operand.vmem [shape: f32[16,16], index: 10, kind: input, shape index: {}]
  %s11 = inlined_call_operand.hbm [shape: f32[16,32], index: 11, kind: output, shape index: {}]
  %s12 = sld [smem:[#allocation0]]
  $region54: #{tpu_custom_call.1} parent=0
    _
  %s14 = ssub.s32 1, %s12
  %s15 = scalar_select 0, %s14, %s12
  $region1: #{tpu_custom_call.1} parent=0
    #allocation2 [shape = 'u8[8192]{0}', space=vmem, size = 0x2000, scoped, tag = 'output window, operand 0, single buffered']
    #allocation3 [shape = 's32[1]{0}', space=sflag, size = 0x4, scoped, tag = 'scoped memory for tpu_custom_call.1']
    %16 = vsyncpa [#allocation3], 0
    // Predicated region
    $region2: #{tpu_custom_call.1} parent=1 // pred_check
      _
    $region3: #{tpu_custom_call.1} parent=1 // pred_check_branch
      %18 = sbr.rel (0) target = $region5
    $region4: #{tpu_custom_call.1} parent=1 // pred_region
      _
    $region5: #{tpu_custom_call.1} parent=1 // pred_fallthru
      _
    // Predicated region
    $region6: #{tpu_custom_call.1} parent=1 // pred_check
      _
    $region7: #{tpu_custom_call.1} parent=1 // pred_check_branch
      %20 = sbr.rel (0) target = $region9
    $region8: #{tpu_custom_call.1} parent=1 // pred_region
      _
    $region9: #{tpu_custom_call.1} parent=1 // pred_fallthru
      _
    // Predicated region
    $region10: #{tpu_custom_call.1} parent=1 // pred_check
      _
    $region11: #{tpu_custom_call.1} parent=1 // pred_check_branch
      %22 = sbr.rel (0) target = $region13
    $region12: #{tpu_custom_call.1} parent=1 // pred_region
      _
    $region13: #{tpu_custom_call.1} parent=1 // pred_fallthru
      _
    // Predicated region
    $region14: #{tpu_custom_call.1} parent=1 // pred_check
      _
    $region15: #{tpu_custom_call.1} parent=1 // pred_check_branch
      %24 = sbr.rel (0) target = $region17
    $region16: #{tpu_custom_call.1} parent=1 // pred_region
      _
    $region17: #{tpu_custom_call.1} parent=1 // pred_fallthru
      _
    // Predicated region
    $region18: #{tpu_custom_call.1} parent=1 // pred_check
      _
    $region19: #{tpu_custom_call.1} parent=1 // pred_check_branch
      %26 = sbr.rel (0) target = $region21
    $region20: #{tpu_custom_call.1} parent=1 // pred_region
      _
    $region21: #{tpu_custom_call.1} parent=1 // pred_fallthru
      _
    // Predicated region
    $region22: #{tpu_custom_call.1} parent=1 // pred_check
      _
    $region23: #{tpu_custom_call.1} parent=1 // pred_check_branch
      %28 = sbr.rel (0) target = $region25
    $region24: #{tpu_custom_call.1} parent=1 // pred_region
      _
    $region25: #{tpu_custom_call.1} parent=1 // pred_fallthru
      _
    // Predicated region
    $region26: #{tpu_custom_call.1} parent=1 // pred_check
      _
    $region27: #{tpu_custom_call.1} parent=1 // pred_check_branch
      %30 = sbr.rel (0) target = $region29
    $region28: #{tpu_custom_call.1} parent=1 // pred_region
      _
    $region29: #{tpu_custom_call.1} parent=1 // pred_fallthru
      _
    // Predicated region
    $region30: #{tpu_custom_call.1} parent=1 // pred_check
      _
    $region31: #{tpu_custom_call.1} parent=1 // pred_check_branch
      %32 = sbr.rel (0) target = $region33
    $region32: #{tpu_custom_call.1} parent=1 // pred_region
      _
    $region33: #{tpu_custom_call.1} parent=1 // pred_fallthru
      _
    // Predicated region
    $region34: #{tpu_custom_call.1} parent=1 // pred_check
      _
    $region35: #{tpu_custom_call.1} parent=1 // pred_check_branch
      %34 = sbr.rel (0) target = $region37
    $region36: #{tpu_custom_call.1} parent=1 // pred_region
      _
    $region37: #{tpu_custom_call.1} parent=1 // pred_fallthru
      _
    // Predicated region
    $region38: #{tpu_custom_call.1} parent=1 // pred_check
      _
    $region39: #{tpu_custom_call.1} parent=1 // pred_check_branch
      %36 = sbr.rel (0) target = $region41
    $region40: #{tpu_custom_call.1} parent=1 // pred_region
      _
    $region41: #{tpu_custom_call.1} parent=1 // pred_fallthru
      _
    // Predicated region
    $region42: #{tpu_custom_call.1} parent=1 // pred_check
      _
    $region43: #{tpu_custom_call.1} parent=1 // pred_check_branch
      %38 = sbr.rel (0) target = $region45
    $region44: #{tpu_custom_call.1} parent=1 // pred_region
      _
    $region45: #{tpu_custom_call.1} parent=1 // pred_fallthru
      _
    %v40 = vld [vmem:[%s0] sm:$0xff]
    %v41 = vld [vmem:[%s0 + $0x8] sm:$0xff]
    %v42 = vmul.f32 %v40, %v40
    %v43 = vmul.f32 %v41, %v41
    %vm44 = vcmask 261120
    %v45 = vsel %vm44, %v42, 0.0
    %46 = vadd.xlane.f32.xlu0 %v45
    %v47 = vpop.xlane.xlu0 %46
    %v48 = vsel %vm44, %v43, 0.0
    %49 = vadd.xlane.f32.xlu0 %v48
    %v50 = vpop.xlane.xlu0 %49
    %v51 = vrcp.pop 32.0
    %v52 = vmul.f32 %v47, %v51
    %v53 = vmul.f32 %v50, %v51
    %v54 = vadd.f32 %v52, 1e-05
    %v55 = vadd.f32 %v53, 1e-05
    %v56 = vrsqrt.pop %v54
    %v57 = vrsqrt.pop %v55
    %v58 = vmul.f32 %v40, %v56
    %v59 = vmul.f32 %v41, %v57
    %v60 = vld [vmem:[%s1] sm:$0x1]
    %v62 = vlaneseq
    %v63 = vshrl.u32 %v62, 7
    %v64 = vsub.s32 0, %v63
    %v65 = vrot.slane %v60, %v64
    %v67 = vmul.f32 %v58, %v65
    %v68 = vmul.f32 %v59, %v65
    %v69 = vpack.c.bf16 %v68, %v67
    %v70 = vld [vmem:[%s2] sm:$0xf]
    %v71 = vld [vmem:[%s2 + $0x4] sm:$0xf]
    %v72 = vld [vmem:[%s2 + $0x8] sm:$0xf]
    %v73 = vld [vmem:[%s2 + $0xc] sm:$0xf]
    %v74 = vld [vmem:[%s2 + $0x10] sm:$0xf]
    %v75 = vld [vmem:[%s2 + $0x14] sm:$0xf]
    %v76 = vld [vmem:[%s2 + $0x18] sm:$0xf]
    %v77 = vld [vmem:[%s2 + $0x1c] sm:$0xf]
    %v78 = vld [vmem:[%s2 + $0x20] sm:$0xf]
    %v79 = vld [vmem:[%s2 + $0x24] sm:$0xf]
    %v80 = vld [vmem:[%s2 + $0x28] sm:$0xf]
    %v81 = vld [vmem:[%s2 + $0x2c] sm:$0xf]
    %v82 = vld [vmem:[%s2 + $0x30] sm:$0xf]
    %v83 = vld [vmem:[%s2 + $0x34] sm:$0xf]
    %v84 = vld [vmem:[%s2 + $0x38] sm:$0xf]
    %v85 = vld [vmem:[%s2 + $0x3c] sm:$0xf]
    %v90 = vunpack.c.l.b16 %v70
    %v91 = vunpack.c.l.b16 %v71
    %v92 = vunpack.c.l.b16 %v72
    %v93 = vunpack.c.l.b16 %v73
    %v94 = vpack.c.b16 %v91, %v90
    %v95 = vpack.c.b16 %v93, %v92
    %v99 = vsel %vm44, %v69, 0
    %101 = vmatprep.subr.bf16.mxu0 0
    %102 = vmatpush1.bf16.msra.mxu0 %v94
    %103 = vmatprep.subr.bf16.mxu0 0
    %104 = vmatpush1.bf16.msra.mxu0 %v95
    %105 = vmatprep.subr.bf16.mxu0 0
    %106 = vmatpush1.bf16.msra.mxu0 0
    %107 = vmatprep.subr.bf16.mxu0 0
    %108 = vmatpush1.bf16.msra.mxu0 0
    %109 = vmatprep.subr.bf16.mxu0 0
    %110 = vmatpush1.bf16.msra.mxu0 0
    %111 = vmatprep.subr.bf16.mxu0 0
    %112 = vmatpush1.bf16.msra.mxu0 0
    %113 = vmatprep.subr.bf16.mxu0 0
    %114 = vmatpush1.bf16.msra.mxu0 0
    %115 = vmatprep.subr.bf16.mxu0 0
    %116 = vmatpush1.bf16.msra.mxu0 0
    %117 = vmatprep.subr.bf16.mxu0 0
    %118 = vmatpush1.bf16.msra.mxu0 0
    %119 = vmatprep.subr.bf16.mxu0 0
    %120 = vmatpush1.bf16.msra.mxu0 0
    %121 = vmatprep.subr.bf16.mxu0 0
    %122 = vmatpush1.bf16.msra.mxu0 0
    %123 = vmatprep.subr.bf16.mxu0 0
    %124 = vmatpush1.bf16.msra.mxu0 0
    %125 = vmatprep.subr.bf16.mxu0 0
    %126 = vmatpush1.bf16.msra.mxu0 0
    %127 = vmatprep.subr.bf16.mxu0 0
    %128 = vmatpush1.bf16.msra.mxu0 0
    %129 = vmatprep.subr.bf16.mxu0 0
    %130 = vmatpush1.bf16.msra.mxu0 0
    %131 = vmatprep.subr.bf16.mxu0 0
    %132 = vmatpush1.bf16.msra.mxu0 0
    %133 = vmatprep.mubr.bf16.mxu0 0
    %134 = vmatmul.mubr.bf16.gmra.mrb[0].mxu0 %v99
    %v135 = vpop.f32.mrb[0].mxu0
    %v136 = vadd.f32 0.0, %v135
    %v137 = vpop.f32.mrb[0].mxu0
    %v138 = vpop.f32.mrb[0].mxu0
    %v139 = vadd.f32 0.0, %v138
    %v140 = vpop.f32.mrb[0].mxu0
    %141 = vdwg.mxu0
    %v146 = vunpack.c.l.b16 %v74
    %v147 = vunpack.c.l.b16 %v75
    %v148 = vunpack.c.l.b16 %v76
    %v149 = vunpack.c.l.b16 %v77
    %v150 = vpack.c.b16 %v147, %v146
    %v151 = vpack.c.b16 %v149, %v148
    %154 = vmatprep.subr.bf16.mxu0 0
    %155 = vmatpush1.bf16.msra.mxu0 %v150
    %156 = vmatprep.subr.bf16.mxu0 0
    %157 = vmatpush1.bf16.msra.mxu0 %v151
    %158 = vmatprep.subr.bf16.mxu0 0
    %159 = vmatpush1.bf16.msra.mxu0 0
    %160 = vmatprep.subr.bf16.mxu0 0
    %161 = vmatpush1.bf16.msra.mxu0 0
    %162 = vmatprep.subr.bf16.mxu0 0
    %163 = vmatpush1.bf16.msra.mxu0 0
    %164 = vmatprep.subr.bf16.mxu0 0
    %165 = vmatpush1.bf16.msra.mxu0 0
    %166 = vmatprep.subr.bf16.mxu0 0
    %167 = vmatpush1.bf16.msra.mxu0 0
    %168 = vmatprep.subr.bf16.mxu0 0
    %169 = vmatpush1.bf16.msra.mxu0 0
    %170 = vmatprep.subr.bf16.mxu0 0
    %171 = vmatpush1.bf16.msra.mxu0 0
    %172 = vmatprep.subr.bf16.mxu0 0
    %173 = vmatpush1.bf16.msra.mxu0 0
    %174 = vmatprep.subr.bf16.mxu0 0
    %175 = vmatpush1.bf16.msra.mxu0 0
    %176 = vmatprep.subr.bf16.mxu0 0
    %177 = vmatpush1.bf16.msra.mxu0 0
    %178 = vmatprep.subr.bf16.mxu0 0
    %179 = vmatpush1.bf16.msra.mxu0 0
    %180 = vmatprep.subr.bf16.mxu0 0
    %181 = vmatpush1.bf16.msra.mxu0 0
    %182 = vmatprep.subr.bf16.mxu0 0
    %183 = vmatpush1.bf16.msra.mxu0 0
    %184 = vmatprep.subr.bf16.mxu0 0
    %185 = vmatpush1.bf16.msra.mxu0 0
    %186 = vmatprep.mubr.bf16.mxu0 0
    %187 = vmatmul.mubr.bf16.gmra.mrb[0].mxu0 %v99
    %v188 = vpop.f32.mrb[0].mxu0
    %v189 = vadd.f32 0.0, %v188
    %v190 = vpop.f32.mrb[0].mxu0
    %v191 = vpop.f32.mrb[0].mxu0
    %v192 = vadd.f32 0.0, %v191
    %v193 = vpop.f32.mrb[0].mxu0
    %194 = vdwg.mxu0
    %v199 = vunpack.c.l.b16 %v78
    %v200 = vunpack.c.l.b16 %v79
    %v201 = vunpack.c.l.b16 %v80
    %v202 = vunpack.c.l.b16 %v81
    %v203 = vpack.c.b16 %v200, %v199
    %v204 = vpack.c.b16 %v202, %v201
    %207 = vmatprep.subr.bf16.mxu0 0
    %208 = vmatpush1.bf16.msra.mxu0 %v203
    %209 = vmatprep.subr.bf16.mxu0 0
    %210 = vmatpush1.bf16.msra.mxu0 %v204
    %211 = vmatprep.subr.bf16.mxu0 0
    %212 = vmatpush1.bf16.msra.mxu0 0
    %213 = vmatprep.subr.bf16.mxu0 0
    %214 = vmatpush1.bf16.msra.mxu0 0
    %215 = vmatprep.subr.bf16.mxu0 0
    %216 = vmatpush1.bf16.msra.mxu0 0
    %217 = vmatprep.subr.bf16.mxu0 0
    %218 = vmatpush1.bf16.msra.mxu0 0
    %219 = vmatprep.subr.bf16.mxu0 0
    %220 = vmatpush1.bf16.msra.mxu0 0
    %221 = vmatprep.subr.bf16.mxu0 0
    %222 = vmatpush1.bf16.msra.mxu0 0
    %223 = vmatprep.subr.bf16.mxu0 0
    %224 = vmatpush1.bf16.msra.mxu0 0
    %225 = vmatprep.subr.bf16.mxu0 0
    %226 = vmatpush1.bf16.msra.mxu0 0
    %227 = vmatprep.subr.bf16.mxu0 0
    %228 = vmatpush1.bf16.msra.mxu0 0
    %229 = vmatprep.subr.bf16.mxu0 0
    %230 = vmatpush1.bf16.msra.mxu0 0
    %231 = vmatprep.subr.bf16.mxu0 0
    %232 = vmatpush1.bf16.msra.mxu0 0
    %233 = vmatprep.subr.bf16.mxu0 0
    %234 = vmatpush1.bf16.msra.mxu0 0
    %235 = vmatprep.subr.bf16.mxu0 0
    %236 = vmatpush1.bf16.msra.mxu0 0
    %237 = vmatprep.subr.bf16.mxu0 0
    %238 = vmatpush1.bf16.msra.mxu0 0
    %239 = vmatprep.mubr.bf16.mxu0 0
    %240 = vmatmul.mubr.bf16.gmra.mrb[0].mxu0 %v99
    %v241 = vpop.f32.mrb[0].mxu0
    %v242 = vadd.f32 0.0, %v241
    %v243 = vpop.f32.mrb[0].mxu0
    %v244 = vpop.f32.mrb[0].mxu0
    %v245 = vadd.f32 0.0, %v244
    %v246 = vpop.f32.mrb[0].mxu0
    %247 = vdwg.mxu0
    %v252 = vunpack.c.l.b16 %v82
    %v253 = vunpack.c.l.b16 %v83
    %v254 = vunpack.c.l.b16 %v84
    %v255 = vunpack.c.l.b16 %v85
    %v256 = vpack.c.b16 %v253, %v252
    %v257 = vpack.c.b16 %v255, %v254
    %260 = vmatprep.subr.bf16.mxu0 0
    %261 = vmatpush1.bf16.msra.mxu0 %v256
    %262 = vmatprep.subr.bf16.mxu0 0
    %263 = vmatpush1.bf16.msra.mxu0 %v257
    %264 = vmatprep.subr.bf16.mxu0 0
    %265 = vmatpush1.bf16.msra.mxu0 0
    %266 = vmatprep.subr.bf16.mxu0 0
    %267 = vmatpush1.bf16.msra.mxu0 0
    %268 = vmatprep.subr.bf16.mxu0 0
    %269 = vmatpush1.bf16.msra.mxu0 0
    %270 = vmatprep.subr.bf16.mxu0 0
    %271 = vmatpush1.bf16.msra.mxu0 0
    %272 = vmatprep.subr.bf16.mxu0 0
    %273 = vmatpush1.bf16.msra.mxu0 0
    %274 = vmatprep.subr.bf16.mxu0 0
    %275 = vmatpush1.bf16.msra.mxu0 0
    %276 = vmatprep.subr.bf16.mxu0 0
    %277 = vmatpush1.bf16.msra.mxu0 0
    %278 = vmatprep.subr.bf16.mxu0 0
    %279 = vmatpush1.bf16.msra.mxu0 0
    %280 = vmatprep.subr.bf16.mxu0 0
    %281 = vmatpush1.bf16.msra.mxu0 0
    %282 = vmatprep.subr.bf16.mxu0 0
    %283 = vmatpush1.bf16.msra.mxu0 0
    %284 = vmatprep.subr.bf16.mxu0 0
    %285 = vmatpush1.bf16.msra.mxu0 0
    %286 = vmatprep.subr.bf16.mxu0 0
    %287 = vmatpush1.bf16.msra.mxu0 0
    %288 = vmatprep.subr.bf16.mxu0 0
    %289 = vmatpush1.bf16.msra.mxu0 0
    %290 = vmatprep.subr.bf16.mxu0 0
    %291 = vmatpush1.bf16.msra.mxu0 0
    %292 = vmatprep.mubr.bf16.mxu0 0
    %293 = vmatmul.mubr.bf16.gmra.mrb[0].mxu0 %v99
    %v294 = vpop.f32.mrb[0].mxu0
    %v295 = vadd.f32 0.0, %v294
    %v296 = vpop.f32.mrb[0].mxu0
    %v297 = vpop.f32.mrb[0].mxu0
    %v298 = vadd.f32 0.0, %v297
    %v299 = vpop.f32.mrb[0].mxu0
    %300 = vdwg.mxu0
    %v301 = vld [vmem:[%s3] sm:$0xf]
    %v302 = vld [vmem:[%s3 + $0x4] sm:$0xf]
    %v303 = vld [vmem:[%s3 + $0x8] sm:$0xf]
    %v304 = vld [vmem:[%s3 + $0xc] sm:$0xf]
    %v305 = vld [vmem:[%s3 + $0x10] sm:$0xf]
    %v306 = vld [vmem:[%s3 + $0x14] sm:$0xf]
    %v307 = vld [vmem:[%s3 + $0x18] sm:$0xf]
    %v308 = vld [vmem:[%s3 + $0x1c] sm:$0xf]
    %v309 = vld [vmem:[%s3 + $0x20] sm:$0xf]
    %v310 = vld [vmem:[%s3 + $0x24] sm:$0xf]
    %v311 = vld [vmem:[%s3 + $0x28] sm:$0xf]
    %v312 = vld [vmem:[%s3 + $0x2c] sm:$0xf]
    %v313 = vld [vmem:[%s3 + $0x30] sm:$0xf]
    %v314 = vld [vmem:[%s3 + $0x34] sm:$0xf]
    %v315 = vld [vmem:[%s3 + $0x38] sm:$0xf]
    %v316 = vld [vmem:[%s3 + $0x3c] sm:$0xf]
    %v321 = vunpack.c.l.b16 %v301
    %v322 = vunpack.c.l.b16 %v302
    %v323 = vunpack.c.l.b16 %v303
    %v324 = vunpack.c.l.b16 %v304
    %v325 = vpack.c.b16 %v322, %v321
    %v326 = vpack.c.b16 %v324, %v323
    %329 = vmatprep.subr.bf16.mxu0 0
    %330 = vmatpush1.bf16.msra.mxu0 %v325
    %331 = vmatprep.subr.bf16.mxu0 0
    %332 = vmatpush1.bf16.msra.mxu0 %v326
    %333 = vmatprep.subr.bf16.mxu0 0
    %334 = vmatpush1.bf16.msra.mxu0 0
    %335 = vmatprep.subr.bf16.mxu0 0
    %336 = vmatpush1.bf16.msra.mxu0 0
    %337 = vmatprep.subr.bf16.mxu0 0
    %338 = vmatpush1.bf16.msra.mxu0 0
    %339 = vmatprep.subr.bf16.mxu0 0
    %340 = vmatpush1.bf16.msra.mxu0 0
    %341 = vmatprep.subr.bf16.mxu0 0
    %342 = vmatpush1.bf16.msra.mxu0 0
    %343 = vmatprep.subr.bf16.mxu0 0
    %344 = vmatpush1.bf16.msra.mxu0 0
    %345 = vmatprep.subr.bf16.mxu0 0
    %346 = vmatpush1.bf16.msra.mxu0 0
    %347 = vmatprep.subr.bf16.mxu0 0
    %348 = vmatpush1.bf16.msra.mxu0 0
    %349 = vmatprep.subr.bf16.mxu0 0
    %350 = vmatpush1.bf16.msra.mxu0 0
    %351 = vmatprep.subr.bf16.mxu0 0
    %352 = vmatpush1.bf16.msra.mxu0 0
    %353 = vmatprep.subr.bf16.mxu0 0
    %354 = vmatpush1.bf16.msra.mxu0 0
    %355 = vmatprep.subr.bf16.mxu0 0
    %356 = vmatpush1.bf16.msra.mxu0 0
    %357 = vmatprep.subr.bf16.mxu0 0
    %358 = vmatpush1.bf16.msra.mxu0 0
    %359 = vmatprep.subr.bf16.mxu0 0
    %360 = vmatpush1.bf16.msra.mxu0 0
    %361 = vmatprep.mubr.bf16.mxu0 0
    %362 = vmatmul.mubr.bf16.gmra.mrb[0].mxu0 %v99
    %v363 = vpop.f32.mrb[0].mxu0
    %v364 = vadd.f32 0.0, %v363
    %v365 = vpop.f32.mrb[0].mxu0
    %v366 = vpop.f32.mrb[0].mxu0
    %v367 = vadd.f32 0.0, %v366
    %v368 = vpop.f32.mrb[0].mxu0
    %369 = vdwg.mxu0
    %v374 = vunpack.c.l.b16 %v305
    %v375 = vunpack.c.l.b16 %v306
    %v376 = vunpack.c.l.b16 %v307
    %v377 = vunpack.c.l.b16 %v308
    %v378 = vpack.c.b16 %v375, %v374
    %v379 = vpack.c.b16 %v377, %v376
    %382 = vmatprep.subr.bf16.mxu0 0
    %383 = vmatpush1.bf16.msra.mxu0 %v378
    %384 = vmatprep.subr.bf16.mxu0 0
    %385 = vmatpush1.bf16.msra.mxu0 %v379
    %386 = vmatprep.subr.bf16.mxu0 0
    %387 = vmatpush1.bf16.msra.mxu0 0
    %388 = vmatprep.subr.bf16.mxu0 0
    %389 = vmatpush1.bf16.msra.mxu0 0
    %390 = vmatprep.subr.bf16.mxu0 0
    %391 = vmatpush1.bf16.msra.mxu0 0
    %392 = vmatprep.subr.bf16.mxu0 0
    %393 = vmatpush1.bf16.msra.mxu0 0
    %394 = vmatprep.subr.bf16.mxu0 0
    %395 = vmatpush1.bf16.msra.mxu0 0
    %396 = vmatprep.subr.bf16.mxu0 0
    %397 = vmatpush1.bf16.msra.mxu0 0
    %398 = vmatprep.subr.bf16.mxu0 0
    %399 = vmatpush1.bf16.msra.mxu0 0
    %400 = vmatprep.subr.bf16.mxu0 0
    %401 = vmatpush1.bf16.msra.mxu0 0
    %402 = vmatprep.subr.bf16.mxu0 0
    %403 = vmatpush1.bf16.msra.mxu0 0
    %404 = vmatprep.subr.bf16.mxu0 0
    %405 = vmatpush1.bf16.msra.mxu0 0
    %406 = vmatprep.subr.bf16.mxu0 0
    %407 = vmatpush1.bf16.msra.mxu0 0
    %408 = vmatprep.subr.bf16.mxu0 0
    %409 = vmatpush1.bf16.msra.mxu0 0
    %410 = vmatprep.subr.bf16.mxu0 0
    %411 = vmatpush1.bf16.msra.mxu0 0
    %412 = vmatprep.subr.bf16.mxu0 0
    %413 = vmatpush1.bf16.msra.mxu0 0
    %414 = vmatprep.mubr.bf16.mxu0 0
    %415 = vmatmul.mubr.bf16.gmra.mrb[0].mxu0 %v99
    %v416 = vpop.f32.mrb[0].mxu0
    %v417 = vadd.f32 0.0, %v416
    %v418 = vpop.f32.mrb[0].mxu0
    %v419 = vpop.f32.mrb[0].mxu0
    %v420 = vadd.f32 0.0, %v419
    %v421 = vpop.f32.mrb[0].mxu0
    %422 = vdwg.mxu0
    %v427 = vunpack.c.l.b16 %v309
    %v428 = vunpack.c.l.b16 %v310
    %v429 = vunpack.c.l.b16 %v311
    %v430 = vunpack.c.l.b16 %v312
    %v431 = vpack.c.b16 %v428, %v427
    %v432 = vpack.c.b16 %v430, %v429
    %435 = vmatprep.subr.bf16.mxu0 0
    %436 = vmatpush1.bf16.msra.mxu0 %v431
    %437 = vmatprep.subr.bf16.mxu0 0
    %438 = vmatpush1.bf16.msra.mxu0 %v432
    %439 = vmatprep.subr.bf16.mxu0 0
    %440 = vmatpush1.bf16.msra.mxu0 0
    %441 = vmatprep.subr.bf16.mxu0 0
    %442 = vmatpush1.bf16.msra.mxu0 0
    %443 = vmatprep.subr.bf16.mxu0 0
    %444 = vmatpush1.bf16.msra.mxu0 0
    %445 = vmatprep.subr.bf16.mxu0 0
    %446 = vmatpush1.bf16.msra.mxu0 0
    %447 = vmatprep.subr.bf16.mxu0 0
    %448 = vmatpush1.bf16.msra.mxu0 0
    %449 = vmatprep.subr.bf16.mxu0 0
    %450 = vmatpush1.bf16.msra.mxu0 0
    %451 = vmatprep.subr.bf16.mxu0 0
    %452 = vmatpush1.bf16.msra.mxu0 0
    %453 = vmatprep.subr.bf16.mxu0 0
    %454 = vmatpush1.bf16.msra.mxu0 0
    %455 = vmatprep.subr.bf16.mxu0 0
    %456 = vmatpush1.bf16.msra.mxu0 0
    %457 = vmatprep.subr.bf16.mxu0 0
    %458 = vmatpush1.bf16.msra.mxu0 0
    %459 = vmatprep.subr.bf16.mxu0 0
    %460 = vmatpush1.bf16.msra.mxu0 0
    %461 = vmatprep.subr.bf16.mxu0 0
    %462 = vmatpush1.bf16.msra.mxu0 0
    %463 = vmatprep.subr.bf16.mxu0 0
    %464 = vmatpush1.bf16.msra.mxu0 0
    %465 = vmatprep.subr.bf16.mxu0 0
    %466 = vmatpush1.bf16.msra.mxu0 0
    %467 = vmatprep.mubr.bf16.mxu0 0
    %468 = vmatmul.mubr.bf16.gmra.mrb[0].mxu0 %v99
    %v469 = vpop.f32.mrb[0].mxu0
    %v470 = vadd.f32 0.0, %v469
    %v471 = vpop.f32.mrb[0].mxu0
    %v472 = vpop.f32.mrb[0].mxu0
    %v473 = vadd.f32 0.0, %v472
    %v474 = vpop.f32.mrb[0].mxu0
    %475 = vdwg.mxu0
    %v480 = vunpack.c.l.b16 %v313
    %v481 = vunpack.c.l.b16 %v314
    %v482 = vunpack.c.l.b16 %v315
    %v483 = vunpack.c.l.b16 %v316
    %v484 = vpack.c.b16 %v481, %v480
    %v485 = vpack.c.b16 %v483, %v482
    %488 = vmatprep.subr.bf16.mxu0 0
    %489 = vmatpush1.bf16.msra.mxu0 %v484
    %490 = vmatprep.subr.bf16.mxu0 0
    %491 = vmatpush1.bf16.msra.mxu0 %v485
    %492 = vmatprep.subr.bf16.mxu0 0
    %493 = vmatpush1.bf16.msra.mxu0 0
    %494 = vmatprep.subr.bf16.mxu0 0
    %495 = vmatpush1.bf16.msra.mxu0 0
    %496 = vmatprep.subr.bf16.mxu0 0
    %497 = vmatpush1.bf16.msra.mxu0 0
    %498 = vmatprep.subr.bf16.mxu0 0
    %499 = vmatpush1.bf16.msra.mxu0 0
    %500 = vmatprep.subr.bf16.mxu0 0
    %501 = vmatpush1.bf16.msra.mxu0 0
    %502 = vmatprep.subr.bf16.mxu0 0
    %503 = vmatpush1.bf16.msra.mxu0 0
    %504 = vmatprep.subr.bf16.mxu0 0
    %505 = vmatpush1.bf16.msra.mxu0 0
    %506 = vmatprep.subr.bf16.mxu0 0
    %507 = vmatpush1.bf16.msra.mxu0 0
    %508 = vmatprep.subr.bf16.mxu0 0
    %509 = vmatpush1.bf16.msra.mxu0 0
    %510 = vmatprep.subr.bf16.mxu0 0
    %511 = vmatpush1.bf16.msra.mxu0 0
    %512 = vmatprep.subr.bf16.mxu0 0
    %513 = vmatpush1.bf16.msra.mxu0 0
    %514 = vmatprep.subr.bf16.mxu0 0
    %515 = vmatpush1.bf16.msra.mxu0 0
    %516 = vmatprep.subr.bf16.mxu0 0
    %517 = vmatpush1.bf16.msra.mxu0 0
    %518 = vmatprep.subr.bf16.mxu0 0
    %519 = vmatpush1.bf16.msra.mxu0 0
    %520 = vmatprep.mubr.bf16.mxu0 0
    %521 = vmatmul.mubr.bf16.gmra.mrb[0].mxu0 %v99
    %v522 = vpop.f32.mrb[0].mxu0
    %v523 = vadd.f32 0.0, %v522
    %v524 = vpop.f32.mrb[0].mxu0
    %v525 = vpop.f32.mrb[0].mxu0
    %v526 = vadd.f32 0.0, %v525
    %v527 = vpop.f32.mrb[0].mxu0
    %528 = vdwg.mxu0
    %v529 = vld [vmem:[%s4] sm:$0xf]
    %v530 = vld [vmem:[%s4 + $0x4] sm:$0xf]
    %v531 = vld [vmem:[%s4 + $0x8] sm:$0xf]
    %v532 = vld [vmem:[%s4 + $0xc] sm:$0xf]
    %v533 = vld [vmem:[%s4 + $0x10] sm:$0xf]
    %v534 = vld [vmem:[%s4 + $0x14] sm:$0xf]
    %v535 = vld [vmem:[%s4 + $0x18] sm:$0xf]
    %v536 = vld [vmem:[%s4 + $0x1c] sm:$0xf]
    %v537 = vld [vmem:[%s4 + $0x20] sm:$0xf]
    %v538 = vld [vmem:[%s4 + $0x24] sm:$0xf]
    %v539 = vld [vmem:[%s4 + $0x28] sm:$0xf]
    %v540 = vld [vmem:[%s4 + $0x2c] sm:$0xf]
    %v541 = vld [vmem:[%s4 + $0x30] sm:$0xf]
    %v542 = vld [vmem:[%s4 + $0x34] sm:$0xf]
    %v543 = vld [vmem:[%s4 + $0x38] sm:$0xf]
    %v544 = vld [vmem:[%s4 + $0x3c] sm:$0xf]
    %v549 = vunpack.c.l.b16 %v529
    %v550 = vunpack.c.l.b16 %v530
    %v551 = vunpack.c.l.b16 %v531
    %v552 = vunpack.c.l.b16 %v532
    %v553 = vpack.c.b16 %v550, %v549
    %v554 = vpack.c.b16 %v552, %v551
    %557 = vmatprep.subr.bf16.mxu0 0
    %558 = vmatpush1.bf16.msra.mxu0 %v553
    %559 = vmatprep.subr.bf16.mxu0 0
    %560 = vmatpush1.bf16.msra.mxu0 %v554
    %561 = vmatprep.subr.bf16.mxu0 0
    %562 = vmatpush1.bf16.msra.mxu0 0
    %563 = vmatprep.subr.bf16.mxu0 0
    %564 = vmatpush1.bf16.msra.mxu0 0
    %565 = vmatprep.subr.bf16.mxu0 0
    %566 = vmatpush1.bf16.msra.mxu0 0
    %567 = vmatprep.subr.bf16.mxu0 0
    %568 = vmatpush1.bf16.msra.mxu0 0
    %569 = vmatprep.subr.bf16.mxu0 0
    %570 = vmatpush1.bf16.msra.mxu0 0
    %571 = vmatprep.subr.bf16.mxu0 0
    %572 = vmatpush1.bf16.msra.mxu0 0
    %573 = vmatprep.subr.bf16.mxu0 0
    %574 = vmatpush1.bf16.msra.mxu0 0
    %575 = vmatprep.subr.bf16.mxu0 0
    %576 = vmatpush1.bf16.msra.mxu0 0
    %577 = vmatprep.subr.bf16.mxu0 0
    %578 = vmatpush1.bf16.msra.mxu0 0
    %579 = vmatprep.subr.bf16.mxu0 0
    %580 = vmatpush1.bf16.msra.mxu0 0
    %581 = vmatprep.subr.bf16.mxu0 0
    %582 = vmatpush1.bf16.msra.mxu0 0
    %583 = vmatprep.subr.bf16.mxu0 0
    %584 = vmatpush1.bf16.msra.mxu0 0
    %585 = vmatprep.subr.bf16.mxu0 0
    %586 = vmatpush1.bf16.msra.mxu0 0
    %587 = vmatprep.subr.bf16.mxu0 0
    %588 = vmatpush1.bf16.msra.mxu0 0
    %589 = vmatprep.mubr.bf16.mxu0 0
    %590 = vmatmul.mubr.bf16.gmra.mrb[0].mxu0 %v99
    %v591 = vpop.f32.mrb[0].mxu0
    %v592 = vadd.f32 0.0, %v591
    %v593 = vpop.f32.mrb[0].mxu0
    %v594 = vpop.f32.mrb[0].mxu0
    %v595 = vadd.f32 0.0, %v594
    %v596 = vpop.f32.mrb[0].mxu0
    %597 = vdwg.mxu0
    %v602 = vunpack.c.l.b16 %v533
    %v603 = vunpack.c.l.b16 %v534
    %v604 = vunpack.c.l.b16 %v535
    %v605 = vunpack.c.l.b16 %v536
    %v606 = vpack.c.b16 %v603, %v602
    %v607 = vpack.c.b16 %v605, %v604
    %610 = vmatprep.subr.bf16.mxu0 0
    %611 = vmatpush1.bf16.msra.mxu0 %v606
    %612 = vmatprep.subr.bf16.mxu0 0
    %613 = vmatpush1.bf16.msra.mxu0 %v607
    %614 = vmatprep.subr.bf16.mxu0 0
    %615 = vmatpush1.bf16.msra.mxu0 0
    %616 = vmatprep.subr.bf16.mxu0 0
    %617 = vmatpush1.bf16.msra.mxu0 0
    %618 = vmatprep.subr.bf16.mxu0 0
    %619 = vmatpush1.bf16.msra.mxu0 0
    %620 = vmatprep.subr.bf16.mxu0 0
    %621 = vmatpush1.bf16.msra.mxu0 0
    %622 = vmatprep.subr.bf16.mxu0 0
    %623 = vmatpush1.bf16.msra.mxu0 0
    %624 = vmatprep.subr.bf16.mxu0 0
    %625 = vmatpush1.bf16.msra.mxu0 0
    %626 = vmatprep.subr.bf16.mxu0 0
    %627 = vmatpush1.bf16.msra.mxu0 0
    %628 = vmatprep.subr.bf16.mxu0 0
    %629 = vmatpush1.bf16.msra.mxu0 0
    %630 = vmatprep.subr.bf16.mxu0 0
    %631 = vmatpush1.bf16.msra.mxu0 0
    %632 = vmatprep.subr.bf16.mxu0 0
    %633 = vmatpush1.bf16.msra.mxu0 0
    %634 = vmatprep.subr.bf16.mxu0 0
    %635 = vmatpush1.bf16.msra.mxu0 0
    %636 = vmatprep.subr.bf16.mxu0 0
    %637 = vmatpush1.bf16.msra.mxu0 0
    %638 = vmatprep.subr.bf16.mxu0 0
    %639 = vmatpush1.bf16.msra.mxu0 0
    %640 = vmatprep.subr.bf16.mxu0 0
    %641 = vmatpush1.bf16.msra.mxu0 0
    %642 = vmatprep.mubr.bf16.mxu0 0
    %643 = vmatmul.mubr.bf16.gmra.mrb[0].mxu0 %v99
    %v644 = vpop.f32.mrb[0].mxu0
    %v645 = vadd.f32 0.0, %v644
    %v646 = vpop.f32.mrb[0].mxu0
    %v647 = vpop.f32.mrb[0].mxu0
    %v648 = vadd.f32 0.0, %v647
    %v649 = vpop.f32.mrb[0].mxu0
    %650 = vdwg.mxu0
    %v655 = vunpack.c.l.b16 %v537
    %v656 = vunpack.c.l.b16 %v538
    %v657 = vunpack.c.l.b16 %v539
    %v658 = vunpack.c.l.b16 %v540
    %v659 = vpack.c.b16 %v656, %v655
    %v660 = vpack.c.b16 %v658, %v657
    %663 = vmatprep.subr.bf16.mxu0 0
    %664 = vmatpush1.bf16.msra.mxu0 %v659
    %665 = vmatprep.subr.bf16.mxu0 0
    %666 = vmatpush1.bf16.msra.mxu0 %v660
    %667 = vmatprep.subr.bf16.mxu0 0
    %668 = vmatpush1.bf16.msra.mxu0 0
    %669 = vmatprep.subr.bf16.mxu0 0
    %670 = vmatpush1.bf16.msra.mxu0 0
    %671 = vmatprep.subr.bf16.mxu0 0
    %672 = vmatpush1.bf16.msra.mxu0 0
    %673 = vmatprep.subr.bf16.mxu0 0
    %674 = vmatpush1.bf16.msra.mxu0 0
    %675 = vmatprep.subr.bf16.mxu0 0
    %676 = vmatpush1.bf16.msra.mxu0 0
    %677 = vmatprep.subr.bf16.mxu0 0
    %678 = vmatpush1.bf16.msra.mxu0 0
    %679 = vmatprep.subr.bf16.mxu0 0
    %680 = vmatpush1.bf16.msra.mxu0 0
    %681 = vmatprep.subr.bf16.mxu0 0
    %682 = vmatpush1.bf16.msra.mxu0 0
    %683 = vmatprep.subr.bf16.mxu0 0
    %684 = vmatpush1.bf16.msra.mxu0 0
    %685 = vmatprep.subr.bf16.mxu0 0
    %686 = vmatpush1.bf16.msra.mxu0 0
    %687 = vmatprep.subr.bf16.mxu0 0
    %688 = vmatpush1.bf16.msra.mxu0 0
    %689 = vmatprep.subr.bf16.mxu0 0
    %690 = vmatpush1.bf16.msra.mxu0 0
    %691 = vmatprep.subr.bf16.mxu0 0
    %692 = vmatpush1.bf16.msra.mxu0 0
    %693 = vmatprep.subr.bf16.mxu0 0
    %694 = vmatpush1.bf16.msra.mxu0 0
    %695 = vmatprep.mubr.bf16.mxu0 0
    %696 = vmatmul.mubr.bf16.gmra.mrb[0].mxu0 %v99
    %v697 = vpop.f32.mrb[0].mxu0
    %v698 = vadd.f32 0.0, %v697
    %v699 = vpop.f32.mrb[0].mxu0
    %v700 = vpop.f32.mrb[0].mxu0
    %v701 = vadd.f32 0.0, %v700
    %v702 = vpop.f32.mrb[0].mxu0
    %703 = vdwg.mxu0
    %v708 = vunpack.c.l.b16 %v541
    %v709 = vunpack.c.l.b16 %v542
    %v710 = vunpack.c.l.b16 %v543
    %v711 = vunpack.c.l.b16 %v544
    %v712 = vpack.c.b16 %v709, %v708
    %v713 = vpack.c.b16 %v711, %v710
    %716 = vmatprep.subr.bf16.mxu0 0
    %717 = vmatpush1.bf16.msra.mxu0 %v712
    %718 = vmatprep.subr.bf16.mxu0 0
    %719 = vmatpush1.bf16.msra.mxu0 %v713
    %720 = vmatprep.subr.bf16.mxu0 0
    %721 = vmatpush1.bf16.msra.mxu0 0
    %722 = vmatprep.subr.bf16.mxu0 0
    %723 = vmatpush1.bf16.msra.mxu0 0
    %724 = vmatprep.subr.bf16.mxu0 0
    %725 = vmatpush1.bf16.msra.mxu0 0
    %726 = vmatprep.subr.bf16.mxu0 0
    %727 = vmatpush1.bf16.msra.mxu0 0
    %728 = vmatprep.subr.bf16.mxu0 0
    %729 = vmatpush1.bf16.msra.mxu0 0
    %730 = vmatprep.subr.bf16.mxu0 0
    %731 = vmatpush1.bf16.msra.mxu0 0
    %732 = vmatprep.subr.bf16.mxu0 0
    %733 = vmatpush1.bf16.msra.mxu0 0
    %734 = vmatprep.subr.bf16.mxu0 0
    %735 = vmatpush1.bf16.msra.mxu0 0
    %736 = vmatprep.subr.bf16.mxu0 0
    %737 = vmatpush1.bf16.msra.mxu0 0
    %738 = vmatprep.subr.bf16.mxu0 0
    %739 = vmatpush1.bf16.msra.mxu0 0
    %740 = vmatprep.subr.bf16.mxu0 0
    %741 = vmatpush1.bf16.msra.mxu0 0
    %742 = vmatprep.subr.bf16.mxu0 0
    %743 = vmatpush1.bf16.msra.mxu0 0
    %744 = vmatprep.subr.bf16.mxu0 0
    %745 = vmatpush1.bf16.msra.mxu0 0
    %746 = vmatprep.subr.bf16.mxu0 0
    %747 = vmatpush1.bf16.msra.mxu0 0
    %748 = vmatprep.mubr.bf16.mxu0 0
    %749 = vmatmul.mubr.bf16.gmra.mrb[0].mxu0 %v99
    %v750 = vpop.f32.mrb[0].mxu0
    %v751 = vadd.f32 0.0, %v750
    %v752 = vpop.f32.mrb[0].mxu0
    %v753 = vpop.f32.mrb[0].mxu0
    %v754 = vadd.f32 0.0, %v753
    %v755 = vpop.f32.mrb[0].mxu0
    %756 = vdwg.mxu0
    %v757 = vpack.c.bf16 %v139, %v136
    %v758 = vpack.c.bf16 %v192, %v189
    %v759 = vpack.c.bf16 %v245, %v242
    %v760 = vpack.c.bf16 %v298, %v295
    %v761 = vpack.c.bf16 %v367, %v364
    %v762 = vpack.c.bf16 %v420, %v417
    %v763 = vpack.c.bf16 %v473, %v470
    %v764 = vpack.c.bf16 %v526, %v523
    %v765 = vld [vmem:[%s10] sm:$0xff]
    %v766 = vld [vmem:[%s10 + $0x8] sm:$0xff]
    %vm767 = vcmask 64512
    %v769 = vsel %vm767, %v757, 0
    %v772 = vsel %vm767, %v761, 0
    %774 = vmatprep.subr.bf16.mxu0 0
    %775 = vmatpush1.bf16.xpose.msra.mxu0 %v772
    %776 = vmatprep.subr.bf16.mxu0 0
    %777 = vmatpush1.bf16.xpose.msra.mxu0 0
    %778 = vmatprep.subr.bf16.mxu0 0
    %779 = vmatpush1.bf16.xpose.msra.mxu0 0
    %780 = vmatprep.subr.bf16.mxu0 0
    %781 = vmatpush1.bf16.xpose.msra.mxu0 0
    %782 = vmatprep.subr.bf16.mxu0 0
    %783 = vmatpush1.bf16.xpose.msra.mxu0 0
    %784 = vmatprep.subr.bf16.mxu0 0
    %785 = vmatpush1.bf16.xpose.msra.mxu0 0
    %786 = vmatprep.subr.bf16.mxu0 0
    %787 = vmatpush1.bf16.xpose.msra.mxu0 0
    %788 = vmatprep.subr.bf16.mxu0 0
    %789 = vmatpush1.bf16.xpose.msra.mxu0 0
    %790 = vmatprep.subr.bf16.mxu0 0
    %791 = vmatpush1.bf16.xpose.msra.mxu0 0
    %792 = vmatprep.subr.bf16.mxu0 0
    %793 = vmatpush1.bf16.xpose.msra.mxu0 0
    %794 = vmatprep.subr.bf16.mxu0 0
    %795 = vmatpush1.bf16.xpose.msra.mxu0 0
    %796 = vmatprep.subr.bf16.mxu0 0
    %797 = vmatpush1.bf16.xpose.msra.mxu0 0
    %798 = vmatprep.subr.bf16.mxu0 0
    %799 = vmatpush1.bf16.xpose.msra.mxu0 0
    %800 = vmatprep.subr.bf16.mxu0 0
    %801 = vmatpush1.bf16.xpose.msra.mxu0 0
    %802 = vmatprep.subr.bf16.mxu0 0
    %803 = vmatpush1.bf16.xpose.msra.mxu0 0
    %804 = vmatprep.subr.bf16.mxu0 0
    %805 = vmatpush1.bf16.xpose.msra.mxu0 0
    %806 = vmatprep.mubr.bf16.mxu0 0
    %807 = vmatmul.mubr.bf16.gmra.mrb[0].mxu0 %v769
    %v808 = vpop.f32.mrb[0].mxu0
    %v809 = vadd.f32 %v765, %v808
    %v810 = vpop.f32.mrb[0].mxu0
    %v811 = vpop.f32.mrb[0].mxu0
    %v812 = vadd.f32 %v766, %v811
    %v813 = vpop.f32.mrb[0].mxu0
    %814 = vdwg.mxu0
    %v816 = vsel %vm767, %v758, 0
    %v819 = vsel %vm767, %v762, 0
    %821 = vmatprep.subr.bf16.mxu0 0
    %822 = vmatpush1.bf16.xpose.msra.mxu0 %v819
    %823 = vmatprep.subr.bf16.mxu0 0
    %824 = vmatpush1.bf16.xpose.msra.mxu0 0
    %825 = vmatprep.subr.bf16.mxu0 0
    %826 = vmatpush1.bf16.xpose.msra.mxu0 0
    %827 = vmatprep.subr.bf16.mxu0 0
    %828 = vmatpush1.bf16.xpose.msra.mxu0 0
    %829 = vmatprep.subr.bf16.mxu0 0
    %830 = vmatpush1.bf16.xpose.msra.mxu0 0
    %831 = vmatprep.subr.bf16.mxu0 0
    %832 = vmatpush1.bf16.xpose.msra.mxu0 0
    %833 = vmatprep.subr.bf16.mxu0 0
    %834 = vmatpush1.bf16.xpose.msra.mxu0 0
    %835 = vmatprep.subr.bf16.mxu0 0
    %836 = vmatpush1.bf16.xpose.msra.mxu0 0
    %837 = vmatprep.subr.bf16.mxu0 0
    %838 = vmatpush1.bf16.xpose.msra.mxu0 0
    %839 = vmatprep.subr.bf16.mxu0 0
    %840 = vmatpush1.bf16.xpose.msra.mxu0 0
    %841 = vmatprep.subr.bf16.mxu0 0
    %842 = vmatpush1.bf16.xpose.msra.mxu0 0
    %843 = vmatprep.subr.bf16.mxu0 0
    %844 = vmatpush1.bf16.xpose.msra.mxu0 0
    %845 = vmatprep.subr.bf16.mxu0 0
    %846 = vmatpush1.bf16.xpose.msra.mxu0 0
    %847 = vmatprep.subr.bf16.mxu0 0
    %848 = vmatpush1.bf16.xpose.msra.mxu0 0
    %849 = vmatprep.subr.bf16.mxu0 0
    %850 = vmatpush1.bf16.xpose.msra.mxu0 0
    %851 = vmatprep.subr.bf16.mxu0 0
    %852 = vmatpush1.bf16.xpose.msra.mxu0 0
    %853 = vmatprep.mubr.bf16.mxu0 0
    %854 = vmatmul.mubr.bf16.gmra.mrb[0].mxu0 %v816
    %v855 = vpop.f32.mrb[0].mxu0
    %v856 = vadd.f32 %v765, %v855
    %v857 = vpop.f32.mrb[0].mxu0
    %v858 = vpop.f32.mrb[0].mxu0
    %v859 = vadd.f32 %v766, %v858
    %v860 = vpop.f32.mrb[0].mxu0
    %861 = vdwg.mxu0
    %v863 = vsel %vm767, %v759, 0
    %v866 = vsel %vm767, %v763, 0
    %868 = vmatprep.subr.bf16.mxu0 0
    %869 = vmatpush1.bf16.xpose.msra.mxu0 %v866
    %870 = vmatprep.subr.bf16.mxu0 0
    %871 = vmatpush1.bf16.xpose.msra.mxu0 0
    %872 = vmatprep.subr.bf16.mxu0 0
    %873 = vmatpush1.bf16.xpose.msra.mxu0 0
    %874 = vmatprep.subr.bf16.mxu0 0
    %875 = vmatpush1.bf16.xpose.msra.mxu0 0
    %876 = vmatprep.subr.bf16.mxu0 0
    %877 = vmatpush1.bf16.xpose.msra.mxu0 0
    %878 = vmatprep.subr.bf16.mxu0 0
    %879 = vmatpush1.bf16.xpose.msra.mxu0 0
    %880 = vmatprep.subr.bf16.mxu0 0
    %881 = vmatpush1.bf16.xpose.msra.mxu0 0
    %882 = vmatprep.subr.bf16.mxu0 0
    %883 = vmatpush1.bf16.xpose.msra.mxu0 0
    %884 = vmatprep.subr.bf16.mxu0 0
    %885 = vmatpush1.bf16.xpose.msra.mxu0 0
    %886 = vmatprep.subr.bf16.mxu0 0
    %887 = vmatpush1.bf16.xpose.msra.mxu0 0
    %888 = vmatprep.subr.bf16.mxu0 0
    %889 = vmatpush1.bf16.xpose.msra.mxu0 0
    %890 = vmatprep.subr.bf16.mxu0 0
    %891 = vmatpush1.bf16.xpose.msra.mxu0 0
    %892 = vmatprep.subr.bf16.mxu0 0
    %893 = vmatpush1.bf16.xpose.msra.mxu0 0
    %894 = vmatprep.subr.bf16.mxu0 0
    %895 = vmatpush1.bf16.xpose.msra.mxu0 0
    %896 = vmatprep.subr.bf16.mxu0 0
    %897 = vmatpush1.bf16.xpose.msra.mxu0 0
    %898 = vmatprep.subr.bf16.mxu0 0
    %899 = vmatpush1.bf16.xpose.msra.mxu0 0
    %900 = vmatprep.mubr.bf16.mxu0 0
    %901 = vmatmul.mubr.bf16.gmra.mrb[0].mxu0 %v863
    %v902 = vpop.f32.mrb[0].mxu0
    %v903 = vadd.f32 %v765, %v902
    %v904 = vpop.f32.mrb[0].mxu0
    %v905 = vpop.f32.mrb[0].mxu0
    %v906 = vadd.f32 %v766, %v905
    %v907 = vpop.f32.mrb[0].mxu0
    %908 = vdwg.mxu0
    %v910 = vsel %vm767, %v760, 0
    %v913 = vsel %vm767, %v764, 0
    %915 = vmatprep.subr.bf16.mxu0 0
    %916 = vmatpush1.bf16.xpose.msra.mxu0 %v913
    %917 = vmatprep.subr.bf16.mxu0 0
    %918 = vmatpush1.bf16.xpose.msra.mxu0 0
    %919 = vmatprep.subr.bf16.mxu0 0
    %920 = vmatpush1.bf16.xpose.msra.mxu0 0
    %921 = vmatprep.subr.bf16.mxu0 0
    %922 = vmatpush1.bf16.xpose.msra.mxu0 0
    %923 = vmatprep.subr.bf16.mxu0 0
    %924 = vmatpush1.bf16.xpose.msra.mxu0 0
    %925 = vmatprep.subr.bf16.mxu0 0
    %926 = vmatpush1.bf16.xpose.msra.mxu0 0
    %927 = vmatprep.subr.bf16.mxu0 0
    %928 = vmatpush1.bf16.xpose.msra.mxu0 0
    %929 = vmatprep.subr.bf16.mxu0 0
    %930 = vmatpush1.bf16.xpose.msra.mxu0 0
    %931 = vmatprep.subr.bf16.mxu0 0
    %932 = vmatpush1.bf16.xpose.msra.mxu0 0
    %933 = vmatprep.subr.bf16.mxu0 0
    %934 = vmatpush1.bf16.xpose.msra.mxu0 0
    %935 = vmatprep.subr.bf16.mxu0 0
    %936 = vmatpush1.bf16.xpose.msra.mxu0 0
    %937 = vmatprep.subr.bf16.mxu0 0
    %938 = vmatpush1.bf16.xpose.msra.mxu0 0
    %939 = vmatprep.subr.bf16.mxu0 0
    %940 = vmatpush1.bf16.xpose.msra.mxu0 0
    %941 = vmatprep.subr.bf16.mxu0 0
    %942 = vmatpush1.bf16.xpose.msra.mxu0 0
    %943 = vmatprep.subr.bf16.mxu0 0
    %944 = vmatpush1.bf16.xpose.msra.mxu0 0
    %945 = vmatprep.subr.bf16.mxu0 0
    %946 = vmatpush1.bf16.xpose.msra.mxu0 0
    %947 = vmatprep.mubr.bf16.mxu0 0
    %948 = vmatmul.mubr.bf16.gmra.mrb[0].mxu0 %v910
    %v949 = vpop.f32.mrb[0].mxu0
    %v950 = vadd.f32 %v765, %v949
    %v951 = vpop.f32.mrb[0].mxu0
    %v952 = vpop.f32.mrb[0].mxu0
    %v953 = vadd.f32 %v766, %v952
    %v954 = vpop.f32.mrb[0].mxu0
    %955 = vdwg.mxu0
    %vm956 = vcmask 130048
    %v957 = vsel %vm956, %v809, -inf
    %958 = vmax.xlane.f32.xlu0 %v957
    %v959 = vpop.xlane.xlu0 %958
    %v960 = vsel %vm956, %v812, -inf
    %961 = vmax.xlane.f32.xlu0 %v960
    %v962 = vpop.xlane.xlu0 %961
    %v963 = vsel %vm956, %v856, -inf
    %964 = vmax.xlane.f32.xlu0 %v963
    %v965 = vpop.xlane.xlu0 %964
    %v966 = vsel %vm956, %v859, -inf
    %967 = vmax.xlane.f32.xlu0 %v966
    %v968 = vpop.xlane.xlu0 %967
    %v969 = vsel %vm956, %v903, -inf
    %970 = vmax.xlane.f32.xlu0 %v969
    %v971 = vpop.xlane.xlu0 %970
    %v972 = vsel %vm956, %v906, -inf
    %973 = vmax.xlane.f32.xlu0 %v972
    %v974 = vpop.xlane.xlu0 %973
    %v975 = vsel %vm956, %v950, -inf
    %976 = vmax.xlane.f32.xlu0 %v975
    %v977 = vpop.xlane.xlu0 %976
    %v978 = vsel %vm956, %v953, -inf
    %979 = vmax.xlane.f32.xlu0 %v978
    %v980 = vpop.xlane.xlu0 %979
    %v981 = vsub.f32 %v809, %v959
    %v982 = vsub.f32 %v812, %v962
    %v983 = vsub.f32 %v856, %v965
    %v984 = vsub.f32 %v859, %v968
    %v985 = vsub.f32 %v903, %v971
    %v986 = vsub.f32 %v906, %v974
    %v987 = vsub.f32 %v950, %v977
    %v988 = vsub.f32 %v953, %v980
    %v989 = vmul.f32 %v981, 1.442695
    %v990 = vpow.pop %v989
    %v991 = vmul.f32 %v982, 1.442695
    %v992 = vpow.pop %v991
    %v993 = vmul.f32 %v983, 1.442695
    %v994 = vpow.pop %v993
    %v995 = vmul.f32 %v984, 1.442695
    %v996 = vpow.pop %v995
    %v997 = vmul.f32 %v985, 1.442695
    %v998 = vpow.pop %v997
    %v999 = vmul.f32 %v986, 1.442695
    %v1000 = vpow.pop %v999
    %v1001 = vmul.f32 %v987, 1.442695
    %v1002 = vpow.pop %v1001
    %v1003 = vmul.f32 %v988, 1.442695
    %v1004 = vpow.pop %v1003
    %v1005 = vsel %vm956, %v990, 0.0
    %1006 = vadd.xlane.f32.xlu0 %v1005
    %v1007 = vpop.xlane.xlu0 %1006
    %v1008 = vsel %vm956, %v992, 0.0
    %1009 = vadd.xlane.f32.xlu0 %v1008
    %v1010 = vpop.xlane.xlu0 %1009
    %v1011 = vsel %vm956, %v994, 0.0
    %1012 = vadd.xlane.f32.xlu0 %v1011
    %v1013 = vpop.xlane.xlu0 %1012
    %v1014 = vsel %vm956, %v996, 0.0
    %1015 = vadd.xlane.f32.xlu0 %v1014
    %v1016 = vpop.xlane.xlu0 %1015
    %v1017 = vsel %vm956, %v998, 0.0
    %1018 = vadd.xlane.f32.xlu0 %v1017
    %v1019 = vpop.xlane.xlu0 %1018
    %v1020 = vsel %vm956, %v1000, 0.0
    %1021 = vadd.xlane.f32.xlu0 %v1020
    %v1022 = vpop.xlane.xlu0 %1021
    %v1023 = vsel %vm956, %v1002, 0.0
    %1024 = vadd.xlane.f32.xlu0 %v1023
    %v1025 = vpop.xlane.xlu0 %1024
    %v1026 = vsel %vm956, %v1004, 0.0
    %1027 = vadd.xlane.f32.xlu0 %v1026
    %v1028 = vpop.xlane.xlu0 %1027
    %v1029 = vrcp.pop %v1007
    %v1030 = vrcp.pop %v1010
    %v1031 = vrcp.pop %v1013
    %v1032 = vrcp.pop %v1016
    %v1033 = vrcp.pop %v1019
    %v1034 = vrcp.pop %v1022
    %v1035 = vrcp.pop %v1025
    %v1036 = vrcp.pop %v1028
    %v1037 = vmul.f32 %v990, %v1029
    %v1038 = vmul.f32 %v992, %v1030
    %v1039 = vmul.f32 %v994, %v1031
    %v1040 = vmul.f32 %v996, %v1032
    %v1041 = vmul.f32 %v998, %v1033
    %v1042 = vmul.f32 %v1000, %v1034
    %v1043 = vmul.f32 %v1002, %v1035
    %v1044 = vmul.f32 %v1004, %v1036
    %v1045 = vpack.c.bf16 %v1038, %v1037
    %v1046 = vpack.c.bf16 %v1040, %v1039
    %v1047 = vpack.c.bf16 %v1042, %v1041
    %v1048 = vpack.c.bf16 %v1044, %v1043
    %v1049 = vpack.c.bf16 %v595, %v592
    %v1050 = vpack.c.bf16 %v648, %v645
    %v1051 = vpack.c.bf16 %v701, %v698
    %v1052 = vpack.c.bf16 %v754, %v751
    %v1054 = vsel %vm956, %v1045, 0
    %1056 = vmatprep.subr.bf16.mxu0 0
    %1057 = vmatpush1.bf16.msra.mxu0 %v1049
    %1058 = vmatprep.subr.bf16.mxu0 0
    %1059 = vmatpush1.bf16.msra.mxu0 0
    %1060 = vmatprep.subr.bf16.mxu0 0
    %1061 = vmatpush1.bf16.msra.mxu0 0
    %1062 = vmatprep.subr.bf16.mxu0 0
    %1063 = vmatpush1.bf16.msra.mxu0 0
    %1064 = vmatprep.subr.bf16.mxu0 0
    %1065 = vmatpush1.bf16.msra.mxu0 0
    %1066 = vmatprep.subr.bf16.mxu0 0
    %1067 = vmatpush1.bf16.msra.mxu0 0
    %1068 = vmatprep.subr.bf16.mxu0 0
    %1069 = vmatpush1.bf16.msra.mxu0 0
    %1070 = vmatprep.subr.bf16.mxu0 0
    %1071 = vmatpush1.bf16.msra.mxu0 0
    %1072 = vmatprep.subr.bf16.mxu0 0
    %1073 = vmatpush1.bf16.msra.mxu0 0
    %1074 = vmatprep.subr.bf16.mxu0 0
    %1075 = vmatpush1.bf16.msra.mxu0 0
    %1076 = vmatprep.subr.bf16.mxu0 0
    %1077 = vmatpush1.bf16.msra.mxu0 0
    %1078 = vmatprep.subr.bf16.mxu0 0
    %1079 = vmatpush1.bf16.msra.mxu0 0
    %1080 = vmatprep.subr.bf16.mxu0 0
    %1081 = vmatpush1.bf16.msra.mxu0 0
    %1082 = vmatprep.subr.bf16.mxu0 0
    %1083 = vmatpush1.bf16.msra.mxu0 0
    %1084 = vmatprep.subr.bf16.mxu0 0
    %1085 = vmatpush1.bf16.msra.mxu0 0
    %1086 = vmatprep.subr.bf16.mxu0 0
    %1087 = vmatpush1.bf16.msra.mxu0 0
    %1088 = vmatprep.mubr.bf16.mxu0 0
    %1089 = vmatmul.mubr.bf16.gmra.mrb[0].mxu0 %v1054
    %v1090 = vpop.f32.mrb[0].mxu0
    %v1091 = vadd.f32 0.0, %v1090
    %v1092 = vpop.f32.mrb[0].mxu0
    %v1093 = vpop.f32.mrb[0].mxu0
    %v1094 = vadd.f32 0.0, %v1093
    %v1095 = vpop.f32.mrb[0].mxu0
    %1096 = vdwg.mxu0
    %v1098 = vsel %vm956, %v1046, 0
    %1100 = vmatprep.subr.bf16.mxu0 0
    %1101 = vmatpush1.bf16.msra.mxu0 %v1050
    %1102 = vmatprep.subr.bf16.mxu0 0
    %1103 = vmatpush1.bf16.msra.mxu0 0
    %1104 = vmatprep.subr.bf16.mxu0 0
    %1105 = vmatpush1.bf16.msra.mxu0 0
    %1106 = vmatprep.subr.bf16.mxu0 0
    %1107 = vmatpush1.bf16.msra.mxu0 0
    %1108 = vmatprep.subr.bf16.mxu0 0
    %1109 = vmatpush1.bf16.msra.mxu0 0
    %1110 = vmatprep.subr.bf16.mxu0 0
    %1111 = vmatpush1.bf16.msra.mxu0 0
    %1112 = vmatprep.subr.bf16.mxu0 0
    %1113 = vmatpush1.bf16.msra.mxu0 0
    %1114 = vmatprep.subr.bf16.mxu0 0
    %1115 = vmatpush1.bf16.msra.mxu0 0
    %1116 = vmatprep.subr.bf16.mxu0 0
    %1117 = vmatpush1.bf16.msra.mxu0 0
    %1118 = vmatprep.subr.bf16.mxu0 0
    %1119 = vmatpush1.bf16.msra.mxu0 0
    %1120 = vmatprep.subr.bf16.mxu0 0
    %1121 = vmatpush1.bf16.msra.mxu0 0
    %1122 = vmatprep.subr.bf16.mxu0 0
    %1123 = vmatpush1.bf16.msra.mxu0 0
    %1124 = vmatprep.subr.bf16.mxu0 0
    %1125 = vmatpush1.bf16.msra.mxu0 0
    %1126 = vmatprep.subr.bf16.mxu0 0
    %1127 = vmatpush1.bf16.msra.mxu0 0
    %1128 = vmatprep.subr.bf16.mxu0 0
    %1129 = vmatpush1.bf16.msra.mxu0 0
    %1130 = vmatprep.subr.bf16.mxu0 0
    %1131 = vmatpush1.bf16.msra.mxu0 0
    %1132 = vmatprep.mubr.bf16.mxu0 0
    %1133 = vmatmul.mubr.bf16.gmra.mrb[0].mxu0 %v1098
    %v1134 = vpop.f32.mrb[0].mxu0
    %v1135 = vadd.f32 0.0, %v1134
    %v1136 = vpop.f32.mrb[0].mxu0
    %v1137 = vpop.f32.mrb[0].mxu0
    %v1138 = vadd.f32 0.0, %v1137
    %v1139 = vpop.f32.mrb[0].mxu0
    %1140 = vdwg.mxu0
    %v1142 = vsel %vm956, %v1047, 0
    %1144 = vmatprep.subr.bf16.mxu0 0
    %1145 = vmatpush1.bf16.msra.mxu0 %v1051
    %1146 = vmatprep.subr.bf16.mxu0 0
    %1147 = vmatpush1.bf16.msra.mxu0 0
    %1148 = vmatprep.subr.bf16.mxu0 0
    %1149 = vmatpush1.bf16.msra.mxu0 0
    %1150 = vmatprep.subr.bf16.mxu0 0
    %1151 = vmatpush1.bf16.msra.mxu0 0
    %1152 = vmatprep.subr.bf16.mxu0 0
    %1153 = vmatpush1.bf16.msra.mxu0 0
    %1154 = vmatprep.subr.bf16.mxu0 0
    %1155 = vmatpush1.bf16.msra.mxu0 0
    %1156 = vmatprep.subr.bf16.mxu0 0
    %1157 = vmatpush1.bf16.msra.mxu0 0
    %1158 = vmatprep.subr.bf16.mxu0 0
    %1159 = vmatpush1.bf16.msra.mxu0 0
    %1160 = vmatprep.subr.bf16.mxu0 0
    %1161 = vmatpush1.bf16.msra.mxu0 0
    %1162 = vmatprep.subr.bf16.mxu0 0
    %1163 = vmatpush1.bf16.msra.mxu0 0
    %1164 = vmatprep.subr.bf16.mxu0 0
    %1165 = vmatpush1.bf16.msra.mxu0 0
    %1166 = vmatprep.subr.bf16.mxu0 0
    %1167 = vmatpush1.bf16.msra.mxu0 0
    %1168 = vmatprep.subr.bf16.mxu0 0
    %1169 = vmatpush1.bf16.msra.mxu0 0
    %1170 = vmatprep.subr.bf16.mxu0 0
    %1171 = vmatpush1.bf16.msra.mxu0 0
    %1172 = vmatprep.subr.bf16.mxu0 0
    %1173 = vmatpush1.bf16.msra.mxu0 0
    %1174 = vmatprep.subr.bf16.mxu0 0
    %1175 = vmatpush1.bf16.msra.mxu0 0
    %1176 = vmatprep.mubr.bf16.mxu0 0
    %1177 = vmatmul.mubr.bf16.gmra.mrb[0].mxu0 %v1142
    %v1178 = vpop.f32.mrb[0].mxu0
    %v1179 = vadd.f32 0.0, %v1178
    %v1180 = vpop.f32.mrb[0].mxu0
    %v1181 = vpop.f32.mrb[0].mxu0
    %v1182 = vadd.f32 0.0, %v1181
    %v1183 = vpop.f32.mrb[0].mxu0
    %1184 = vdwg.mxu0
    %v1186 = vsel %vm956, %v1048, 0
    %1188 = vmatprep.subr.bf16.mxu0 0
    %1189 = vmatpush1.bf16.msra.mxu0 %v1052
    %1190 = vmatprep.subr.bf16.mxu0 0
    %1191 = vmatpush1.bf16.msra.mxu0 0
    %1192 = vmatprep.subr.bf16.mxu0 0
    %1193 = vmatpush1.bf16.msra.mxu0 0
    %1194 = vmatprep.subr.bf16.mxu0 0
    %1195 = vmatpush1.bf16.msra.mxu0 0
    %1196 = vmatprep.subr.bf16.mxu0 0
    %1197 = vmatpush1.bf16.msra.mxu0 0
    %1198 = vmatprep.subr.bf16.mxu0 0
    %1199 = vmatpush1.bf16.msra.mxu0 0
    %1200 = vmatprep.subr.bf16.mxu0 0
    %1201 = vmatpush1.bf16.msra.mxu0 0
    %1202 = vmatprep.subr.bf16.mxu0 0
    %1203 = vmatpush1.bf16.msra.mxu0 0
    %1204 = vmatprep.subr.bf16.mxu0 0
    %1205 = vmatpush1.bf16.msra.mxu0 0
    %1206 = vmatprep.subr.bf16.mxu0 0
    %1207 = vmatpush1.bf16.msra.mxu0 0
    %1208 = vmatprep.subr.bf16.mxu0 0
    %1209 = vmatpush1.bf16.msra.mxu0 0
    %1210 = vmatprep.subr.bf16.mxu0 0
    %1211 = vmatpush1.bf16.msra.mxu0 0
    %1212 = vmatprep.subr.bf16.mxu0 0
    %1213 = vmatpush1.bf16.msra.mxu0 0
    %1214 = vmatprep.subr.bf16.mxu0 0
    %1215 = vmatpush1.bf16.msra.mxu0 0
    %1216 = vmatprep.subr.bf16.mxu0 0
    %1217 = vmatpush1.bf16.msra.mxu0 0
    %1218 = vmatprep.subr.bf16.mxu0 0
    %1219 = vmatpush1.bf16.msra.mxu0 0
    %1220 = vmatprep.mubr.bf16.mxu0 0
    %1221 = vmatmul.mubr.bf16.gmra.mrb[0].mxu0 %v1186
    %v1222 = vpop.f32.mrb[0].mxu0
    %v1223 = vadd.f32 0.0, %v1222
    %v1224 = vpop.f32.mrb[0].mxu0
    %v1225 = vpop.f32.mrb[0].mxu0
    %v1226 = vadd.f32 0.0, %v1225
    %v1227 = vpop.f32.mrb[0].mxu0
    %1228 = vdwg.mxu0
    %v1229 = vpack.c.bf16 %v1094, %v1091
    %v1230 = vpack.c.bf16 %v1138, %v1135
    %v1231 = vpack.c.bf16 %v1182, %v1179
    %v1232 = vpack.c.bf16 %v1226, %v1223
    %v1233 = vld [vmem:[%s5] sm:$0xf]
    %v1234 = vld [vmem:[%s5 + $0x4] sm:$0xf]
    %v1235 = vld [vmem:[%s5 + $0x8] sm:$0xf]
    %v1236 = vld [vmem:[%s5 + $0xc] sm:$0xf]
    %v1238 = vsel %vm767, %v1229, 0
    %vm1240 = vcmask 1043456
    %v1242 = vsel %vm1240, %v1233, 0
    %1244 = vmatprep.subr.bf16.mxu0 0
    %1245 = vmatpush1.bf16.msra.mxu0 %v1242
    %1246 = vmatprep.subr.bf16.mxu0 0
    %1247 = vmatpush1.bf16.msra.mxu0 0
    %1248 = vmatprep.subr.bf16.mxu0 0
    %1249 = vmatpush1.bf16.msra.mxu0 0
    %1250 = vmatprep.subr.bf16.mxu0 0
    %1251 = vmatpush1.bf16.msra.mxu0 0
    %1252 = vmatprep.subr.bf16.mxu0 0
    %1253 = vmatpush1.bf16.msra.mxu0 0
    %1254 = vmatprep.subr.bf16.mxu0 0
    %1255 = vmatpush1.bf16.msra.mxu0 0
    %1256 = vmatprep.subr.bf16.mxu0 0
    %1257 = vmatpush1.bf16.msra.mxu0 0
    %1258 = vmatprep.subr.bf16.mxu0 0
    %1259 = vmatpush1.bf16.msra.mxu0 0
    %1260 = vmatprep.subr.bf16.mxu0 0
    %1261 = vmatpush1.bf16.msra.mxu0 0
    %1262 = vmatprep.subr.bf16.mxu0 0
    %1263 = vmatpush1.bf16.msra.mxu0 0
    %1264 = vmatprep.subr.bf16.mxu0 0
    %1265 = vmatpush1.bf16.msra.mxu0 0
    %1266 = vmatprep.subr.bf16.mxu0 0
    %1267 = vmatpush1.bf16.msra.mxu0 0
    %1268 = vmatprep.subr.bf16.mxu0 0
    %1269 = vmatpush1.bf16.msra.mxu0 0
    %1270 = vmatprep.subr.bf16.mxu0 0
    %1271 = vmatpush1.bf16.msra.mxu0 0
    %1272 = vmatprep.subr.bf16.mxu0 0
    %1273 = vmatpush1.bf16.msra.mxu0 0
    %1274 = vmatprep.subr.bf16.mxu0 0
    %1275 = vmatpush1.bf16.msra.mxu0 0
    %1276 = vmatprep.mubr.bf16.mxu0 0
    %1277 = vmatmul.mubr.bf16.gmra.mrb[0].mxu0 %v1238
    %v1278 = vpop.f32.mrb[0].mxu0
    %v1279 = vadd.f32 0.0, %v1278
    %v1280 = vpop.f32.mrb[0].mxu0
    %v1281 = vpop.f32.mrb[0].mxu0
    %v1282 = vadd.f32 0.0, %v1281
    %v1283 = vpop.f32.mrb[0].mxu0
    %1284 = vdwg.mxu0
    %v1286 = vsel %vm767, %v1230, 0
    %v1289 = vsel %vm1240, %v1234, 0
    %1291 = vmatprep.subr.bf16.mxu0 0
    %1292 = vmatpush1.bf16.msra.mxu0 %v1289
    %1293 = vmatprep.subr.bf16.mxu0 0
    %1294 = vmatpush1.bf16.msra.mxu0 0
    %1295 = vmatprep.subr.bf16.mxu0 0
    %1296 = vmatpush1.bf16.msra.mxu0 0
    %1297 = vmatprep.subr.bf16.mxu0 0
    %1298 = vmatpush1.bf16.msra.mxu0 0
    %1299 = vmatprep.subr.bf16.mxu0 0
    %1300 = vmatpush1.bf16.msra.mxu0 0
    %1301 = vmatprep.subr.bf16.mxu0 0
    %1302 = vmatpush1.bf16.msra.mxu0 0
    %1303 = vmatprep.subr.bf16.mxu0 0
    %1304 = vmatpush1.bf16.msra.mxu0 0
    %1305 = vmatprep.subr.bf16.mxu0 0
    %1306 = vmatpush1.bf16.msra.mxu0 0
    %1307 = vmatprep.subr.bf16.mxu0 0
    %1308 = vmatpush1.bf16.msra.mxu0 0
    %1309 = vmatprep.subr.bf16.mxu0 0
    %1310 = vmatpush1.bf16.msra.mxu0 0
    %1311 = vmatprep.subr.bf16.mxu0 0
    %1312 = vmatpush1.bf16.msra.mxu0 0
    %1313 = vmatprep.subr.bf16.mxu0 0
    %1314 = vmatpush1.bf16.msra.mxu0 0
    %1315 = vmatprep.subr.bf16.mxu0 0
    %1316 = vmatpush1.bf16.msra.mxu0 0
    %1317 = vmatprep.subr.bf16.mxu0 0
    %1318 = vmatpush1.bf16.msra.mxu0 0
    %1319 = vmatprep.subr.bf16.mxu0 0
    %1320 = vmatpush1.bf16.msra.mxu0 0
    %1321 = vmatprep.subr.bf16.mxu0 0
    %1322 = vmatpush1.bf16.msra.mxu0 0
    %1323 = vmatprep.mubr.bf16.mxu0 0
    %1324 = vmatmul.mubr.bf16.gmra.mrb[0].mxu0 %v1286
    %v1325 = vpop.f32.mrb[0].mxu0
    %v1326 = vadd.f32 0.0, %v1325
    %v1327 = vpop.f32.mrb[0].mxu0
    %v1328 = vpop.f32.mrb[0].mxu0
    %v1329 = vadd.f32 0.0, %v1328
    %v1330 = vpop.f32.mrb[0].mxu0
    %1331 = vdwg.mxu0
    %v1333 = vsel %vm767, %v1231, 0
    %v1336 = vsel %vm1240, %v1235, 0
    %1338 = vmatprep.subr.bf16.mxu0 0
    %1339 = vmatpush1.bf16.msra.mxu0 %v1336
    %1340 = vmatprep.subr.bf16.mxu0 0
    %1341 = vmatpush1.bf16.msra.mxu0 0
    %1342 = vmatprep.subr.bf16.mxu0 0
    %1343 = vmatpush1.bf16.msra.mxu0 0
    %1344 = vmatprep.subr.bf16.mxu0 0
    %1345 = vmatpush1.bf16.msra.mxu0 0
    %1346 = vmatprep.subr.bf16.mxu0 0
    %1347 = vmatpush1.bf16.msra.mxu0 0
    %1348 = vmatprep.subr.bf16.mxu0 0
    %1349 = vmatpush1.bf16.msra.mxu0 0
    %1350 = vmatprep.subr.bf16.mxu0 0
    %1351 = vmatpush1.bf16.msra.mxu0 0
    %1352 = vmatprep.subr.bf16.mxu0 0
    %1353 = vmatpush1.bf16.msra.mxu0 0
    %1354 = vmatprep.subr.bf16.mxu0 0
    %1355 = vmatpush1.bf16.msra.mxu0 0
    %1356 = vmatprep.subr.bf16.mxu0 0
    %1357 = vmatpush1.bf16.msra.mxu0 0
    %1358 = vmatprep.subr.bf16.mxu0 0
    %1359 = vmatpush1.bf16.msra.mxu0 0
    %1360 = vmatprep.subr.bf16.mxu0 0
    %1361 = vmatpush1.bf16.msra.mxu0 0
    %1362 = vmatprep.subr.bf16.mxu0 0
    %1363 = vmatpush1.bf16.msra.mxu0 0
    %1364 = vmatprep.subr.bf16.mxu0 0
    %1365 = vmatpush1.bf16.msra.mxu0 0
    %1366 = vmatprep.subr.bf16.mxu0 0
    %1367 = vmatpush1.bf16.msra.mxu0 0
    %1368 = vmatprep.subr.bf16.mxu0 0
    %1369 = vmatpush1.bf16.msra.mxu0 0
    %1370 = vmatprep.mubr.bf16.mxu0 0
    %1371 = vmatmul.mubr.bf16.gmra.mrb[0].mxu0 %v1333
    %v1372 = vpop.f32.mrb[0].mxu0
    %v1373 = vadd.f32 0.0, %v1372
    %v1374 = vpop.f32.mrb[0].mxu0
    %v1375 = vpop.f32.mrb[0].mxu0
    %v1376 = vadd.f32 0.0, %v1375
    %v1377 = vpop.f32.mrb[0].mxu0
    %1378 = vdwg.mxu0
    %v1380 = vsel %vm767, %v1232, 0
    %v1383 = vsel %vm1240, %v1236, 0
    %1385 = vmatprep.subr.bf16.mxu0 0
    %1386 = vmatpush1.bf16.msra.mxu0 %v1383
    %1387 = vmatprep.subr.bf16.mxu0 0
    %1388 = vmatpush1.bf16.msra.mxu0 0
    %1389 = vmatprep.subr.bf16.mxu0 0
    %1390 = vmatpush1.bf16.msra.mxu0 0
    %1391 = vmatprep.subr.bf16.mxu0 0
    %1392 = vmatpush1.bf16.msra.mxu0 0
    %1393 = vmatprep.subr.bf16.mxu0 0
    %1394 = vmatpush1.bf16.msra.mxu0 0
    %1395 = vmatprep.subr.bf16.mxu0 0
    %1396 = vmatpush1.bf16.msra.mxu0 0
    %1397 = vmatprep.subr.bf16.mxu0 0
    %1398 = vmatpush1.bf16.msra.mxu0 0
    %1399 = vmatprep.subr.bf16.mxu0 0
    %1400 = vmatpush1.bf16.msra.mxu0 0
    %1401 = vmatprep.subr.bf16.mxu0 0
    %1402 = vmatpush1.bf16.msra.mxu0 0
    %1403 = vmatprep.subr.bf16.mxu0 0
    %1404 = vmatpush1.bf16.msra.mxu0 0
    %1405 = vmatprep.subr.bf16.mxu0 0
    %1406 = vmatpush1.bf16.msra.mxu0 0
    %1407 = vmatprep.subr.bf16.mxu0 0
    %1408 = vmatpush1.bf16.msra.mxu0 0
    %1409 = vmatprep.subr.bf16.mxu0 0
    %1410 = vmatpush1.bf16.msra.mxu0 0
    %1411 = vmatprep.subr.bf16.mxu0 0
    %1412 = vmatpush1.bf16.msra.mxu0 0
    %1413 = vmatprep.subr.bf16.mxu0 0
    %1414 = vmatpush1.bf16.msra.mxu0 0
    %1415 = vmatprep.subr.bf16.mxu0 0
    %1416 = vmatpush1.bf16.msra.mxu0 0
    %1417 = vmatprep.mubr.bf16.mxu0 0
    %1418 = vmatmul.mubr.bf16.gmra.mrb[0].mxu0 %v1380
    %v1419 = vpop.f32.mrb[0].mxu0
    %v1420 = vadd.f32 0.0, %v1419
    %v1421 = vpop.f32.mrb[0].mxu0
    %v1422 = vpop.f32.mrb[0].mxu0
    %v1423 = vadd.f32 0.0, %v1422
    %v1424 = vpop.f32.mrb[0].mxu0
    %1425 = vdwg.mxu0
    %v1426 = vsel %vm44, %v1279, 0.0
    %v1427 = vsel %vm44, %v1326, 0.0
    %v1428 = vadd.f32 %v1426, %v1427
    %v1429 = vsel %vm44, %v1373, 0.0
    %v1430 = vadd.f32 %v1428, %v1429
    %v1431 = vsel %vm44, %v1420, 0.0
    %v1432 = vadd.f32 %v1430, %v1431
    %v1433 = vsel %vm44, %v1282, 0.0
    %v1434 = vsel %vm44, %v1329, 0.0
    %v1435 = vadd.f32 %v1433, %v1434
    %v1436 = vsel %vm44, %v1376, 0.0
    %v1437 = vadd.f32 %v1435, %v1436
    %v1438 = vsel %vm44, %v1423, 0.0
    %v1439 = vadd.f32 %v1437, %v1438
    %v1440 = vadd.f32 %v40, %v1432
    %v1441 = vadd.f32 %v41, %v1439
    %v1442 = vmul.f32 %v1440, %v1440
    %v1443 = vmul.f32 %v1441, %v1441
    %v1444 = vsel %vm44, %v1442, 0.0
    %1445 = vadd.xlane.f32.xlu0 %v1444
    %v1446 = vpop.xlane.xlu0 %1445
    %v1447 = vsel %vm44, %v1443, 0.0
    %1448 = vadd.xlane.f32.xlu0 %v1447
    %v1449 = vpop.xlane.xlu0 %1448
    %v1450 = vmul.f32 %v1446, %v51
    %v1451 = vmul.f32 %v1449, %v51
    %v1452 = vadd.f32 %v1450, 1e-05
    %v1453 = vadd.f32 %v1451, 1e-05
    %v1454 = vrsqrt.pop %v1452
    %v1455 = vrsqrt.pop %v1453
    %v1456 = vmul.f32 %v1440, %v1454
    %v1457 = vmul.f32 %v1441, %v1455
    %v1458 = vld [vmem:[%s6] sm:$0x1]
    %v1460 = vlaneseq
    %v1461 = vshrl.u32 %v1460, 7
    %v1462 = vsub.s32 0, %v1461
    %v1463 = vrot.slane %v1458, %v1462
    %v1465 = vmul.f32 %v1456, %v1463
    %v1466 = vmul.f32 %v1457, %v1463
    %v1467 = vpack.c.bf16 %v1466, %v1465
    %v1468 = vld [vmem:[%s7] sm:$0xf]
    %v1469 = vld [vmem:[%s7 + $0x4] sm:$0xf]
    %v1470 = vld [vmem:[%s7 + $0x8] sm:$0xf]
    %v1471 = vld [vmem:[%s7 + $0xc] sm:$0xf]
    %v1476 = vunpack.c.l.b16 %v1468
    %v1477 = vunpack.c.l.b16 %v1469
    %v1478 = vunpack.c.l.b16 %v1470
    %v1479 = vunpack.c.l.b16 %v1471
    %v1480 = vpack.c.b16 %v1477, %v1476
    %v1481 = vpack.c.b16 %v1479, %v1478
    %v1485 = vsel %vm44, %v1467, 0
    %1487 = vmatprep.subr.bf16.mxu0 0
    %1488 = vmatpush1.bf16.msra.mxu0 %v1480
    %1489 = vmatprep.subr.bf16.mxu0 0
    %1490 = vmatpush1.bf16.msra.mxu0 %v1481
    %1491 = vmatprep.subr.bf16.mxu0 0
    %1492 = vmatpush1.bf16.msra.mxu0 0
    %1493 = vmatprep.subr.bf16.mxu0 0
    %1494 = vmatpush1.bf16.msra.mxu0 0
    %1495 = vmatprep.subr.bf16.mxu0 0
    %1496 = vmatpush1.bf16.msra.mxu0 0
    %1497 = vmatprep.subr.bf16.mxu0 0
    %1498 = vmatpush1.bf16.msra.mxu0 0
    %1499 = vmatprep.subr.bf16.mxu0 0
    %1500 = vmatpush1.bf16.msra.mxu0 0
    %1501 = vmatprep.subr.bf16.mxu0 0
    %1502 = vmatpush1.bf16.msra.mxu0 0
    %1503 = vmatprep.subr.bf16.mxu0 0
    %1504 = vmatpush1.bf16.msra.mxu0 0
    %1505 = vmatprep.subr.bf16.mxu0 0
    %1506 = vmatpush1.bf16.msra.mxu0 0
    %1507 = vmatprep.subr.bf16.mxu0 0
    %1508 = vmatpush1.bf16.msra.mxu0 0
    %1509 = vmatprep.subr.bf16.mxu0 0
    %1510 = vmatpush1.bf16.msra.mxu0 0
    %1511 = vmatprep.subr.bf16.mxu0 0
    %1512 = vmatpush1.bf16.msra.mxu0 0
    %1513 = vmatprep.subr.bf16.mxu0 0
    %1514 = vmatpush1.bf16.msra.mxu0 0
    %1515 = vmatprep.subr.bf16.mxu0 0
    %1516 = vmatpush1.bf16.msra.mxu0 0
    %1517 = vmatprep.subr.bf16.mxu0 0
    %1518 = vmatpush1.bf16.msra.mxu0 0
    %1519 = vmatprep.mubr.bf16.mxu0 0
    %1520 = vmatmul.mubr.bf16.gmra.mrb[0].mxu0 %v1485
    %v1521 = vpop.f32.mrb[0].mxu0
    %v1522 = vadd.f32 0.0, %v1521
    %v1523 = vpop.f32.mrb[0].mxu0
    %v1524 = vpop.f32.mrb[0].mxu0
    %v1525 = vadd.f32 0.0, %v1524
    %v1526 = vpop.f32.mrb[0].mxu0
    %1527 = vdwg.mxu0
    %v1528 = vld [vmem:[%s8] sm:$0xf]
    %v1529 = vld [vmem:[%s8 + $0x4] sm:$0xf]
    %v1530 = vld [vmem:[%s8 + $0x8] sm:$0xf]
    %v1531 = vld [vmem:[%s8 + $0xc] sm:$0xf]
    %v1536 = vunpack.c.l.b16 %v1528
    %v1537 = vunpack.c.l.b16 %v1529
    %v1538 = vunpack.c.l.b16 %v1530
    %v1539 = vunpack.c.l.b16 %v1531
    %v1540 = vpack.c.b16 %v1537, %v1536
    %v1541 = vpack.c.b16 %v1539, %v1538
    %1544 = vmatprep.subr.bf16.mxu0 0
    %1545 = vmatpush1.bf16.msra.mxu0 %v1540
    %1546 = vmatprep.subr.bf16.mxu0 0
    %1547 = vmatpush1.bf16.msra.mxu0 %v1541
    %1548 = vmatprep.subr.bf16.mxu0 0
    %1549 = vmatpush1.bf16.msra.mxu0 0
    %1550 = vmatprep.subr.bf16.mxu0 0
    %1551 = vmatpush1.bf16.msra.mxu0 0
    %1552 = vmatprep.subr.bf16.mxu0 0
    %1553 = vmatpush1.bf16.msra.mxu0 0
    %1554 = vmatprep.subr.bf16.mxu0 0
    %1555 = vmatpush1.bf16.msra.mxu0 0
    %1556 = vmatprep.subr.bf16.mxu0 0
    %1557 = vmatpush1.bf16.msra.mxu0 0
    %1558 = vmatprep.subr.bf16.mxu0 0
    %1559 = vmatpush1.bf16.msra.mxu0 0
    %1560 = vmatprep.subr.bf16.mxu0 0
    %1561 = vmatpush1.bf16.msra.mxu0 0
    %1562 = vmatprep.subr.bf16.mxu0 0
    %1563 = vmatpush1.bf16.msra.mxu0 0
    %1564 = vmatprep.subr.bf16.mxu0 0
    %1565 = vmatpush1.bf16.msra.mxu0 0
    %1566 = vmatprep.subr.bf16.mxu0 0
    %1567 = vmatpush1.bf16.msra.mxu0 0
    %1568 = vmatprep.subr.bf16.mxu0 0
    %1569 = vmatpush1.bf16.msra.mxu0 0
    %1570 = vmatprep.subr.bf16.mxu0 0
    %1571 = vmatpush1.bf16.msra.mxu0 0
    %1572 = vmatprep.subr.bf16.mxu0 0
    %1573 = vmatpush1.bf16.msra.mxu0 0
    %1574 = vmatprep.subr.bf16.mxu0 0
    %1575 = vmatpush1.bf16.msra.mxu0 0
    %1576 = vmatprep.mubr.bf16.mxu0 0
    %1577 = vmatmul.mubr.bf16.gmra.mrb[0].mxu0 %v1485
    %v1578 = vpop.f32.mrb[0].mxu0
    %v1579 = vadd.f32 0.0, %v1578
    %v1580 = vpop.f32.mrb[0].mxu0
    %v1581 = vpop.f32.mrb[0].mxu0
    %v1582 = vadd.f32 0.0, %v1581
    %v1583 = vpop.f32.mrb[0].mxu0
    %1584 = vdwg.mxu0
    %v1585 = vxor.u32 %v1579, 2147483648
    %v1586 = vxor.u32 %v1582, 2147483648
    %v1587 = vmul.f32 %v1585, 1.442695
    %v1588 = vpow.pop %v1587
    %v1589 = vmul.f32 %v1586, 1.442695
    %v1590 = vpow.pop %v1589
    %v1591 = vadd.f32 %v1588, 1.0
    %v1592 = vadd.f32 %v1590, 1.0
    %v1593 = vrcp.pop %v1591
    %v1594 = vmul.f32 1.0, %v1593
    %v1595 = vrcp.pop %v1592
    %v1596 = vmul.f32 1.0, %v1595
    %v1597 = vmul.f32 %v1579, %v1594
    %v1598 = vmul.f32 %v1582, %v1596
    %v1599 = vmul.f32 %v1522, %v1597
    %v1600 = vmul.f32 %v1525, %v1598
    %v1601 = vpack.c.bf16 %v1600, %v1599
    %v1602 = vld [vmem:[%s9] sm:$0xf]
    %v1603 = vld [vmem:[%s9 + $0x4] sm:$0xf]
    %v1604 = vld [vmem:[%s9 + $0x8] sm:$0xf]
    %v1605 = vld [vmem:[%s9 + $0xc] sm:$0xf]
    %v1606 = vld [vmem:[%s9 + $0x10] sm:$0xf]
    %v1607 = vld [vmem:[%s9 + $0x14] sm:$0xf]
    %v1608 = vld [vmem:[%s9 + $0x18] sm:$0xf]
    %v1609 = vld [vmem:[%s9 + $0x1c] sm:$0xf]
    %v1618 = vunpack.c.l.b16 %v1602
    %v1619 = vunpack.c.l.b16 %v1603
    %v1620 = vunpack.c.l.b16 %v1604
    %v1621 = vunpack.c.l.b16 %v1605
    %v1622 = vunpack.c.l.b16 %v1606
    %v1623 = vunpack.c.l.b16 %v1607
    %v1624 = vunpack.c.l.b16 %v1608
    %v1625 = vunpack.c.l.b16 %v1609
    %v1626 = vpack.c.b16 %v1619, %v1618
    %v1627 = vpack.c.b16 %v1621, %v1620
    %v1628 = vpack.c.b16 %v1623, %v1622
    %v1629 = vpack.c.b16 %v1625, %v1624
    %vm1634 = vcmask 523264
    %v1636 = vsel %vm1634, %v1601, 0
    %1638 = vmatprep.subr.bf16.mxu0 0
    %1639 = vmatpush1.bf16.msra.mxu0 %v1626
    %1640 = vmatprep.subr.bf16.mxu0 0
    %1641 = vmatpush1.bf16.msra.mxu0 %v1627
    %1642 = vmatprep.subr.bf16.mxu0 0
    %1643 = vmatpush1.bf16.msra.mxu0 %v1628
    %1644 = vmatprep.subr.bf16.mxu0 0
    %1645 = vmatpush1.bf16.msra.mxu0 %v1629
    %1646 = vmatprep.subr.bf16.mxu0 0
    %1647 = vmatpush1.bf16.msra.mxu0 0
    %1648 = vmatprep.subr.bf16.mxu0 0
    %1649 = vmatpush1.bf16.msra.mxu0 0
    %1650 = vmatprep.subr.bf16.mxu0 0
    %1651 = vmatpush1.bf16.msra.mxu0 0
    %1652 = vmatprep.subr.bf16.mxu0 0
    %1653 = vmatpush1.bf16.msra.mxu0 0
    %1654 = vmatprep.subr.bf16.mxu0 0
    %1655 = vmatpush1.bf16.msra.mxu0 0
    %1656 = vmatprep.subr.bf16.mxu0 0
    %1657 = vmatpush1.bf16.msra.mxu0 0
    %1658 = vmatprep.subr.bf16.mxu0 0
    %1659 = vmatpush1.bf16.msra.mxu0 0
    %1660 = vmatprep.subr.bf16.mxu0 0
    %1661 = vmatpush1.bf16.msra.mxu0 0
    %1662 = vmatprep.subr.bf16.mxu0 0
    %1663 = vmatpush1.bf16.msra.mxu0 0
    %1664 = vmatprep.subr.bf16.mxu0 0
    %1665 = vmatpush1.bf16.msra.mxu0 0
    %1666 = vmatprep.subr.bf16.mxu0 0
    %1667 = vmatpush1.bf16.msra.mxu0 0
    %1668 = vmatprep.subr.bf16.mxu0 0
    %1669 = vmatpush1.bf16.msra.mxu0 0
    %1670 = vmatprep.mubr.bf16.mxu0 0
    %1671 = vmatmul.mubr.bf16.gmra.mrb[0].mxu0 %v1636
    %v1672 = vpop.f32.mrb[0].mxu0
    %v1673 = vadd.f32 0.0, %v1672
    %v1674 = vpop.f32.mrb[0].mxu0
    %v1675 = vpop.f32.mrb[0].mxu0
    %v1676 = vadd.f32 0.0, %v1675
    %v1677 = vpop.f32.mrb[0].mxu0
    %1678 = vdwg.mxu0
    %v1679 = vadd.f32 %v1440, %v1673
    %v1680 = vadd.f32 %v1441, %v1676
    %1681 = vst.msk [vmem:[#allocation2] sm:$0xff] %vm44, %v1679
    %1682 = vst.msk [vmem:[#allocation2 + $0x8] sm:$0xff] %vm44, %v1680
    // Predicated region
    $region46: #{tpu_custom_call.1} parent=1 // pred_check
      _
    $region47: #{tpu_custom_call.1} parent=1 // pred_check_branch
      %1684 = sbr.rel (0) target = $region49
    $region48: #{tpu_custom_call.1} parent=1 // pred_region
      %s1686 = ssub.s32 256, 256
      %1687 = vsyncadd [#allocation3], %s1686
      %s1688 = sshll.u32 [#allocation2], 4
      %s1689 = int_to_ptr.vmem [resolvable:$true] %s1688
      %1694 = dma.vmem_to_hbm [thread:$0]  %s1689, 256, %s11, [#allocation3], 128, 128, 8
    $region49: #{tpu_custom_call.1} parent=1 // pred_fallthru
      _
    // Predicated region
    $region50: #{tpu_custom_call.1} parent=1 // pred_check
      _
    $region51: #{tpu_custom_call.1} parent=1 // pred_check_branch
      %1696 = sbr.rel (0) target = $region53
    $region52: #{tpu_custom_call.1} parent=1 // pred_region
      %1697 = dma.done [#allocation3], 256
    $region53: #{tpu_custom_call.1} parent=1 // pred_fallthru
      _
    %1698 = vsyncpa [#allocation3], 1

</llo_original>
